<compile_context>
chip_gen: v7x
topology: tpu7x:2x2x1
jax: 0.10.0
libtpu: 0.0.40
codegen_flags: <defaults>
</compile_context>

<pallas_src>
import functools
import math

import numpy as np
import jax
import jax.numpy as jnp
from jax.experimental import pallas as pl
from jax.experimental.pallas import tpu as pltpu

RGB_PAD = 128      # lane-padded output channels for the to_rgb path
CONV_PAD = 8       # sublane-aligned zero padding around the flattened 4x4 map


# ---------------------------------------------------------------------------
# Fused, phase-pipelined kernel: mapping net + initial GBlock + to_rgb[0]
# ---------------------------------------------------------------------------
def generator_kernel(style_ref, w_map_ref, b_map_ref, const_ref,
                     noise_ref, nw_ref, adain_w_ref, adain_b_ref,
                     conv_w_ref, conv_b_ref, mask_ref,
                     rgb1_w_ref, rgb1_b_ref, rgb2_w_ref, rgb2_b_ref,
                     out_ref,
                     smap_ref, xpad_ref, slab_ref, acc_ref,
                     *, n_map_layers, map_w_mul, map_b_mul, style_mul,
                     conv_mul, rgb1_mul, rgb2_mul, B, H, W, C, conv_pad):
    f32 = jnp.float32
    bf16 = jnp.bfloat16
    HW = H * W
    NP = n_map_layers
    p = pl.program_id(0)

    def leaky(v):
        return jnp.where(v >= 0.0, v, 0.2 * v)

    # -------------------- phase 0: PixelNorm on the input style ------------
    @pl.when(p == 0)
    def _():
        x = style_ref[...]                                        # (B, S) f32
        smap_ref[...] = x * jax.lax.rsqrt(
            jnp.mean(x * x, axis=-1, keepdims=True) + 1e-8)

    # ---------- phases [0, NP): one EqualLinear + LeakyReLU per phase ------
    # w_map block (1, S, S) is streamed per phase; equalized-LR scale is
    # applied to the activation ((x*m) @ W == x @ (W*m)), LHS cast to bf16.
    @pl.when(p < NP)
    def _():
        x = smap_ref[...]
        y = jnp.dot((x * map_w_mul).astype(bf16), w_map_ref[0],
                    preferred_element_type=f32)
        y = y + b_map_ref[0] * map_b_mul
        smap_ref[...] = leaky(y)

    def noise_lrelu_adain(h, stage):
        # NoiseInjection (noise shared across channels) + LeakyReLU(0.2)
        h = h + nw_ref[stage] * noise_ref[stage]                  # (B, HW, C)
        h = leaky(h)
        # InstanceNorm2d (no affine, biased variance, eps=1e-5) over spatial
        mu = jnp.mean(h, axis=1, keepdims=True)
        var = jnp.mean((h - mu) * (h - mu), axis=1, keepdims=True)
        hn = (h - mu) * jax.lax.rsqrt(var + 1e-5)
        # fused style affine: EqualLinear(S -> 2C); wscale folded into LHS
        s = (smap_ref[...] * style_mul).astype(bf16)
        gb = jnp.dot(s, adain_w_ref[0], preferred_element_type=f32)
        gb = gb + adain_b_ref[stage]                              # (B, 2C)
        gamma = gb[:, :C]
        beta = gb[:, C:]
        return gamma[:, None, :] * hn + beta[:, None, :]

    # --- phase NP: noise1 + lrelu + AdaIN1 on const, build im2col tap slab -
    @pl.when(p == NP)
    def _():
        h = noise_lrelu_adain(const_ref[...], 0)                  # (B, HW, C)
        # zero only the two pad bands, then write the interior (wscale on act)
        xpad_ref[:, :conv_pad, :] = jnp.zeros((B, conv_pad, C), f32)
        xpad_ref[:, conv_pad + HW:, :] = jnp.zeros((B, conv_pad, C), f32)
        xpad_ref[:, conv_pad:conv_pad + HW, :] = h * conv_mul
        # 9 statically-shifted, column-masked taps, stored bf16 for the MXU
        for ky in (-1, 0, 1):
            for kx in (-1, 0, 1):
                tap = (ky + 1) * 3 + (kx + 1)
                start = conv_pad + ky * W + kx
                sh = xpad_ref[:, start:start + HW, :]
                if kx == -1:
                    sh = sh * mask_ref[0]                         # kill row-wrap
                elif kx == 1:
                    sh = sh * mask_ref[1]
                slab_ref[tap] = sh.astype(bf16).reshape(B * HW, C)
        acc_ref[...] = jnp.zeros((B * HW, C), f32)

    # ---- phases [NP+1, NP+9]: one accumulating conv-tap matmul per phase --
    # conv_w block (1, C, C) is streamed per tap (prefetched during the
    # previous phase's matmul); the K=9C reduction is split across the grid.
    @pl.when(jnp.logical_and(p >= NP + 1, p <= NP + 9))
    def _():
        tap = jnp.maximum(p - (NP + 1), 0)
        acc_ref[...] += jnp.dot(slab_ref[tap], conv_w_ref[0],
                                preferred_element_type=f32)

    # ------ final phase: bias + noise2/lrelu/AdaIN2 + fused to_rgb ---------
    @pl.when(p == NP + 10)
    def _():
        h = acc_ref[...].reshape(B, HW, C) + conv_b_ref[...]
        h = noise_lrelu_adain(h, 1)
        # to_rgb ConvBlock: two 1x1 EqualConv2d + LeakyReLU(0.2), output
        # zero-padded to RGB_PAD lanes for unmasked stores.
        r = jnp.dot((h * rgb1_mul).astype(bf16).reshape(B * HW, C),
                    rgb1_w_ref[...], preferred_element_type=f32)
        r = leaky(r + rgb1_b_ref[...])
        r = jnp.dot(r * rgb2_mul, rgb2_w_ref[...],
                    preferred_element_type=f32)
        r = leaky(r + rgb2_b_ref[...])
        out_ref[...] = r.reshape(B, HW, RGB_PAD)


# ---------------------------------------------------------------------------
# Parameter setup (our own init, laid out for the streamed kernel)
# ---------------------------------------------------------------------------
def init_params(key, *, n_style, n_ch, n_mapping_layers, H, W):
    HW = H * W
    ks = jax.random.split(key, 8)
    lrmul = 0.01
    p = {}
    # mapping EqualLinear (use_wscale, lrmul): init std = 1 / lrmul ; bf16 store
    p["w_map"] = (jax.random.normal(
        ks[0], (n_mapping_layers, n_style, n_style), jnp.float32)
        / lrmul).astype(jnp.bfloat16)
    p["b_map"] = jnp.zeros((n_mapping_layers, 1, n_style), jnp.float32)
    # ConstantInput(n_ch), stored channels-last (1, HW, C)
    const = jax.random.normal(ks[1], (1, n_ch, H, W), jnp.float32)
    p["const"] = jnp.transpose(const, (0, 2, 3, 1)).reshape(1, HW, n_ch)
    # NoiseInjection weights for the two injections, (2, 1, 1, C)
    p["noise_w"] = 0.1 * jax.random.normal(ks[2], (2, 1, 1, n_ch), jnp.float32)
    # AdaIN style affines EqualLinear(S -> 2C), fused gamma|beta along lanes
    wg = jax.random.normal(ks[3], (2, n_style, n_ch), jnp.float32)
    wb = jax.random.normal(ks[4], (2, n_style, n_ch), jnp.float32)
    p["adain_w"] = jnp.concatenate([wg, wb], axis=-1).astype(jnp.bfloat16)
    p["adain_b"] = jnp.concatenate(
        [jnp.ones((2, 1, n_ch), jnp.float32),
         jnp.zeros((2, 1, n_ch), jnp.float32)], axis=-1)          # (2, 1, 2C)
    # GBlock c2: EqualConv2d(C, C, 3, 1, 1) -> per-tap (in, out) mats (9, C, C)
    w_conv = jax.random.normal(ks[5], (n_ch, n_ch, 3, 3), jnp.float32)
    p["conv_w"] = jnp.transpose(w_conv, (2, 3, 1, 0)).reshape(
        9, n_ch, n_ch).astype(jnp.bfloat16)
    p["conv_b"] = jnp.zeros((1, n_ch), jnp.float32)
    # to_rgb ConvBlock weights, zero-padded to RGB_PAD output lanes
    w1 = jax.random.normal(ks[6], (3, n_ch), jnp.float32).T              # (C, 3)
    p["rgb1_w"] = jnp.zeros((n_ch, RGB_PAD), jnp.float32).at[:, :3].set(
        w1).astype(jnp.bfloat16)
    p["rgb1_b"] = jnp.zeros((1, RGB_PAD), jnp.float32)
    w2 = jax.random.normal(ks[7], (3, 3), jnp.float32).T                 # (3, 3)
    p["rgb2_w"] = jnp.zeros((RGB_PAD, RGB_PAD), jnp.float32).at[:3, :3].set(w2)
    p["rgb2_b"] = jnp.zeros((1, RGB_PAD), jnp.float32)
    return p


def _resident_spec(shape):
    nd = len(shape)
    return pl.BlockSpec(tuple(shape), lambda p, _n=nd: (0,) * _n)


# ---------------------------------------------------------------------------
# Wrapper: one pallas_call with a phase grid that streams the big weights
# ---------------------------------------------------------------------------
def generator_forward(style, params, noise_key, *, n_ch, n_style,
                      n_mapping_layers, H=4, W=4):
    B, _ = style.shape
    HW = H * W
    S = n_style
    C = n_ch
    NP = n_mapping_layers
    lrmul = 0.01
    assert CONV_PAD >= W + 1, "CONV_PAD must cover one full row + 1 column"

    # noise ~ randn(B, 1, H, W), shared over channels; one per NoiseInjection
    noise = jax.random.normal(noise_key, (2, B, HW, 1), jnp.float32)

    # static column-validity masks for the flattened 3x3 conv shifts
    xs = np.arange(HW) % W
    conv_mask = jnp.asarray(
        np.stack([(xs >= 1), (xs <= W - 2)]).astype(np.float32)[:, :, None])

    # phases: NP mapping layers, stage1, 9 conv taps, stage2 + to_rgb
    n_phases = NP + 11

    # streamed-weight index maps (clamped so each block index changes at most
    # once -> Pallas prefetches the block during the preceding phase only)
    w_map_idx = lambda p: (jnp.minimum(p, NP - 1), 0, 0)
    conv_idx = lambda p: (jnp.maximum(jnp.minimum(p - (NP + 1), 8), 0), 0, 0)
    adain_idx = lambda p: (jnp.maximum(jnp.minimum(p - (NP + 9), 1), 0), 0, 0)

    in_specs = [
        _resident_spec((B, S)),                                   # style
        pl.BlockSpec((1, S, S), w_map_idx),                       # w_map (bf16)
        pl.BlockSpec((1, 1, S), w_map_idx),                       # b_map
        _resident_spec((1, HW, C)),                               # const
        _resident_spec((2, B, HW, 1)),                            # noise
        _resident_spec((2, 1, 1, C)),                             # noise_w
        pl.BlockSpec((1, S, 2 * C), adain_idx),                   # adain_w (bf16)
        _resident_spec((2, 1, 2 * C)),                            # adain_b
        pl.BlockSpec((1, C, C), conv_idx),                        # conv_w (bf16)
        _resident_spec((1, C)),                                   # conv_b
        _resident_spec((2, HW, 1)),                               # masks
        _resident_spec((C, RGB_PAD)),                             # rgb1_w (bf16)
        _resident_spec((1, RGB_PAD)),                             # rgb1_b
        _resident_spec((RGB_PAD, RGB_PAD)),                       # rgb2_w
        _resident_spec((1, RGB_PAD)),                             # rgb2_b
    ]
    inputs = [style, params["w_map"], params["b_map"], params["const"],
              noise, params["noise_w"], params["adain_w"], params["adain_b"],
              params["conv_w"], params["conv_b"], conv_mask,
              params["rgb1_w"], params["rgb1_b"],
              params["rgb2_w"], params["rgb2_b"]]

    kernel = functools.partial(
        generator_kernel,
        n_map_layers=NP,
        map_w_mul=float(math.sqrt(2.0 / n_style) * lrmul),
        map_b_mul=float(lrmul),
        style_mul=float(math.sqrt(2.0 / n_style)),
        conv_mul=float(math.sqrt(2.0 / (n_ch * 9))),
        rgb1_mul=float(math.sqrt(2.0 / n_ch)),
        rgb2_mul=float(math.sqrt(2.0 / 3.0)),
        B=B, H=H, W=W, C=n_ch, conv_pad=CONV_PAD)

    out = pl.pallas_call(
        kernel,
        grid=(n_phases,),
        in_specs=in_specs,
        out_specs=pl.BlockSpec((B, HW, RGB_PAD), lambda p: (0, 0, 0)),
        out_shape=jax.ShapeDtypeStruct((B, HW, RGB_PAD), jnp.float32),
        scratch_shapes=[
            pltpu.VMEM((B, S), jnp.float32),                      # mapping act
            pltpu.VMEM((B, HW + 2 * CONV_PAD, C), jnp.float32),   # padded map
            pltpu.VMEM((9, B * HW, C), jnp.bfloat16),             # im2col slab
            pltpu.VMEM((B * HW, C), jnp.float32),                 # conv acc
        ],
        compiler_params=pltpu.CompilerParams(
            dimension_semantics=("arbitrary",),
            vmem_limit_bytes=32 * 1024 * 1024),
    )(*inputs)

    # slice the 3 real channels once, return NCHW to match the PyTorch module
    rgb = out[:, :, :3]
    return rgb.reshape(B, H, W, 3).transpose(0, 3, 1, 2)          # (B, 3, H, W)


if __name__ == "__main__":
    B = 2
    n_style = 32            # small stand-in for n_style=512
    n_ch = 32               # small stand-in for n_ch=512
    n_mapping_layers = 8
    H = W = 4               # StyleGAN constant input is 4x4; depth=0 output is 4x4

    key = jax.random.PRNGKey(0)
    k_param, k_style, k_noise = jax.random.split(key, 3)

    params = init_params(k_param, n_style=n_style, n_ch=n_ch,
                         n_mapping_layers=n_mapping_layers, H=H, W=W)
    style = jax.random.normal(k_style, (B, n_style), jnp.float32)

    out = generator_forward(style, params, k_noise, n_ch=n_ch, n_style=n_style,
                            n_mapping_layers=n_mapping_layers, H=H, W=W)
    out = jax.block_until_ready(out)

    assert out.shape == (B, 3, H, W), out.shape
    assert bool(jnp.all(jnp.isfinite(out)))
    print("KERNEL_OK")
</pallas_src>

<mosaic_0001>
module attributes {stable_mosaic.version = 11 : i64} {
  func.func @generator_kernel(%arg0: i32, %arg1: memref<2x32xf32, #tpu.memory_space<vmem>>, %arg2: memref<1x32x32xbf16, #tpu.memory_space<vmem>>, %arg3: memref<1x1x32xf32, #tpu.memory_space<vmem>>, %arg4: memref<1x16x32xf32, #tpu.memory_space<vmem>>, %arg5: memref<2x2x16x1xf32, #tpu.memory_space<vmem>>, %arg6: memref<2x1x1x32xf32, #tpu.memory_space<vmem>>, %arg7: memref<1x32x64xbf16, #tpu.memory_space<vmem>>, %arg8: memref<2x1x64xf32, #tpu.memory_space<vmem>>, %arg9: memref<1x32x32xbf16, #tpu.memory_space<vmem>>, %arg10: memref<1x32xf32, #tpu.memory_space<vmem>>, %arg11: memref<2x16x1xf32, #tpu.memory_space<vmem>>, %arg12: memref<32x128xbf16, #tpu.memory_space<vmem>>, %arg13: memref<1x128xf32, #tpu.memory_space<vmem>>, %arg14: memref<128x128xf32, #tpu.memory_space<vmem>>, %arg15: memref<1x128xf32, #tpu.memory_space<vmem>>, %arg16: memref<2x16x128xf32, #tpu.memory_space<vmem>>, %arg17: memref<2x32xf32, #tpu.memory_space<vmem>>, %arg18: memref<2x32x32xf32, #tpu.memory_space<vmem>>, %arg19: memref<9x32x32xbf16, #tpu.memory_space<vmem>>, %arg20: memref<32x32xf32, #tpu.memory_space<vmem>>) attributes {dimension_semantics = [#tpu.dimension_semantics<arbitrary>], iteration_bounds = array<i64: 19>, scalar_prefetch = 0 : i64, scratch_operands = 4 : i64, tpu.core_type = #tpu.core_type<tc>, window_params = [{pipeline_mode = #tpu.pipeline_mode<synchronous>, transform_indices = @transform_0, window_bounds = array<i64: 2, 32>}, {transform_indices = @transform_1, window_bounds = array<i64: 1, 32, 32>}, {transform_indices = @transform_2, window_bounds = array<i64: 1, 1, 32>}, {pipeline_mode = #tpu.pipeline_mode<synchronous>, transform_indices = @transform_3, window_bounds = array<i64: 1, 16, 32>}, {pipeline_mode = #tpu.pipeline_mode<synchronous>, transform_indices = @transform_4, window_bounds = array<i64: 2, 2, 16, 1>}, {pipeline_mode = #tpu.pipeline_mode<synchronous>, transform_indices = @transform_5, window_bounds = array<i64: 2, 1, 1, 32>}, {transform_indices = @transform_6, window_bounds = array<i64: 1, 32, 64>}, {pipeline_mode = #tpu.pipeline_mode<synchronous>, transform_indices = @transform_7, window_bounds = array<i64: 2, 1, 64>}, {transform_indices = @transform_8, window_bounds = array<i64: 1, 32, 32>}, {pipeline_mode = #tpu.pipeline_mode<synchronous>, transform_indices = @transform_9, window_bounds = array<i64: 1, 32>}, {pipeline_mode = #tpu.pipeline_mode<synchronous>, transform_indices = @transform_10, window_bounds = array<i64: 2, 16, 1>}, {pipeline_mode = #tpu.pipeline_mode<synchronous>, transform_indices = @transform_11, window_bounds = array<i64: 32, 128>}, {pipeline_mode = #tpu.pipeline_mode<synchronous>, transform_indices = @transform_12, window_bounds = array<i64: 1, 128>}, {pipeline_mode = #tpu.pipeline_mode<synchronous>, transform_indices = @transform_13, window_bounds = array<i64: 128, 128>}, {pipeline_mode = #tpu.pipeline_mode<synchronous>, transform_indices = @transform_14, window_bounds = array<i64: 1, 128>}, {pipeline_mode = #tpu.pipeline_mode<synchronous>, transform_indices = @transform_15, window_bounds = array<i64: 2, 16, 128>}]} {
    %c0_i32 = arith.constant 0 : i32
    %0 = arith.cmpi eq, %arg0, %c0_i32 : i32
    %1 = arith.extui %0 : i1 to i32
    %c0_i32_0 = arith.constant 0 : i32
    %2 = arith.cmpi ne, %1, %c0_i32_0 : i32
    scf.if %2 {
      %c0 = arith.constant 0 : index
      %c0_6 = arith.constant 0 : index
      %17 = vector.load %arg1[%c0, %c0_6] : memref<2x32xf32, #tpu.memory_space<vmem>>, vector<2x32xf32>
      %18 = arith.mulf %17, %17 : vector<2x32xf32>
      %cst = arith.constant dense<0.000000e+00> : vector<2xf32>
      %19 = vector.multi_reduction <add>, %18, %cst [1] : vector<2x32xf32> to vector<2xf32>
      %20 = vector.shape_cast %19 : vector<2xf32> to vector<2x1xf32>
      %cst_7 = arith.constant 3.200000e+01 : f32
      %21 = vector.broadcast %cst_7 : f32 to vector<2x1xf32>
      %22 = arith.divf %20, %21 : vector<2x1xf32>
      %cst_8 = arith.constant 9.99999993E-9 : f32
      %23 = vector.broadcast %cst_8 : f32 to vector<2x1xf32>
      %24 = arith.addf %22, %23 : vector<2x1xf32>
      %25 = math.rsqrt %24 : vector<2x1xf32>
      %26 = vector.broadcast %25 : vector<2x1xf32> to vector<2x32xf32>
      %27 = arith.mulf %17, %26 : vector<2x32xf32>
      %c0_9 = arith.constant 0 : index
      %c0_10 = arith.constant 0 : index
      %28 = vector.load %arg17[%c0_9, %c0_10] : memref<2x32xf32, #tpu.memory_space<vmem>>, vector<2x32xf32>
      tpu.vector_store %arg17[%c0_9, %c0_10], %27 {strides = array<i32>} : memref<2x32xf32, #tpu.memory_space<vmem>>, vector<2x32xf32>,
    } else {
    }
    %c8_i32 = arith.constant 8 : i32
    %3 = arith.cmpi slt, %arg0, %c8_i32 : i32
    %4 = arith.extui %3 : i1 to i32
    %c0_i32_1 = arith.constant 0 : i32
    %5 = arith.cmpi ne, %4, %c0_i32_1 : i32
    scf.if %5 {
      %c0 = arith.constant 0 : index
      %c0_6 = arith.constant 0 : index
      %17 = vector.load %arg17[%c0, %c0_6] : memref<2x32xf32, #tpu.memory_space<vmem>>, vector<2x32xf32>
      %cst = arith.constant 2.500000e-03 : f32
      %18 = vector.broadcast %cst : f32 to vector<2x32xf32>
      %19 = arith.mulf %17, %18 : vector<2x32xf32>
      %20 = arith.truncf %19 : vector<2x32xf32> to vector<2x32xbf16>
      %c0_7 = arith.constant 0 : index
      %c0_8 = arith.constant 0 : index
      %c0_9 = arith.constant 0 : index
      %21 = vector.load %arg2[%c0_7, %c0_8, %c0_9] : memref<1x32x32xbf16, #tpu.memory_space<vmem>>, vector<1x32x32xbf16>
      %22 = vector.shape_cast %21 : vector<1x32x32xbf16> to vector<32x32xbf16>
      %cst_10 = arith.constant dense<0.000000e+00> : vector<2x32xf32>
      %23 = tpu.matmul %20, %22, %cst_10 {dimension_numbers = #tpu.dot_dimension_numbers<[1], [0], [0], [1], [0, 0, 1, 1], [], []>} : vector<2x32xbf16>, vector<32x32xbf16>, vector<2x32xf32> -> vector<2x32xf32>
      %c0_11 = arith.constant 0 : index
      %c0_12 = arith.constant 0 : index
      %c0_13 = arith.constant 0 : index
      %24 = vector.load %arg3[%c0_11, %c0_12, %c0_13] : memref<1x1x32xf32, #tpu.memory_space<vmem>>, vector<1x1x32xf32>
      %25 = vector.shape_cast %24 : vector<1x1x32xf32> to vector<1x32xf32>
      %cst_14 = arith.constant 0.00999999977 : f32
      %26 = vector.broadcast %cst_14 : f32 to vector<1x32xf32>
      %27 = arith.mulf %25, %26 : vector<1x32xf32>
      %28 = vector.broadcast %27 : vector<1x32xf32> to vector<2x32xf32>
      %29 = arith.addf %23, %28 : vector<2x32xf32>
      %cst_15 = arith.constant 0.000000e+00 : f32
      %30 = vector.broadcast %cst_15 : f32 to vector<2x32xf32>
      %31 = arith.cmpf oge, %29, %30 : vector<2x32xf32>
      %cst_16 = arith.constant 2.000000e-01 : f32
      %32 = vector.broadcast %cst_16 : f32 to vector<2x32xf32>
      %33 = arith.mulf %32, %29 : vector<2x32xf32>
      %34 = arith.select %31, %29, %33 : vector<2x32xi1>, vector<2x32xf32>
      %c0_17 = arith.constant 0 : index
      %c0_18 = arith.constant 0 : index
      %35 = vector.load %arg17[%c0_17, %c0_18] : memref<2x32xf32, #tpu.memory_space<vmem>>, vector<2x32xf32>
      tpu.vector_store %arg17[%c0_17, %c0_18], %34 {strides = array<i32>} : memref<2x32xf32, #tpu.memory_space<vmem>>, vector<2x32xf32>,
    } else {
    }
    %c8_i32_2 = arith.constant 8 : i32
    %6 = arith.cmpi eq, %arg0, %c8_i32_2 : i32
    %7 = arith.extui %6 : i1 to i32
    %c0_i32_3 = arith.constant 0 : i32
    %8 = arith.cmpi ne, %7, %c0_i32_3 : i32
    scf.if %8 {
      %c0 = arith.constant 0 : index
      %c0_6 = arith.constant 0 : index
      %c0_7 = arith.constant 0 : index
      %17 = vector.load %arg4[%c0, %c0_6, %c0_7] : memref<1x16x32xf32, #tpu.memory_space<vmem>>, vector<1x16x32xf32>
      %c0_8 = arith.constant 0 : index
      %c0_9 = arith.constant 0 : index
      %c0_10 = arith.constant 0 : index
      %c0_11 = arith.constant 0 : index
      %18 = vector.load %arg6[%c0_8, %c0_9, %c0_10, %c0_11] : memref<2x1x1x32xf32, #tpu.memory_space<vmem>>, vector<1x1x1x32xf32>
      %19 = vector.shape_cast %18 : vector<1x1x1x32xf32> to vector<1x1x32xf32>
      %c0_12 = arith.constant 0 : index
      %c0_13 = arith.constant 0 : index
      %c0_14 = arith.constant 0 : index
      %c0_15 = arith.constant 0 : index
      %20 = vector.load %arg5[%c0_12, %c0_13, %c0_14, %c0_15] : memref<2x2x16x1xf32, #tpu.memory_space<vmem>>, vector<1x2x16x1xf32>
      %21 = vector.shape_cast %20 : vector<1x2x16x1xf32> to vector<2x16x1xf32>
      %22 = vector.broadcast %19 : vector<1x1x32xf32> to vector<2x16x32xf32>
      %23 = vector.broadcast %21 : vector<2x16x1xf32> to vector<2x16x32xf32>
      %24 = arith.mulf %22, %23 : vector<2x16x32xf32>
      %25 = vector.broadcast %17 : vector<1x16x32xf32> to vector<2x16x32xf32>
      %26 = arith.addf %25, %24 : vector<2x16x32xf32>
      %cst = arith.constant 0.000000e+00 : f32
      %27 = vector.broadcast %cst : f32 to vector<2x16x32xf32>
      %28 = arith.cmpf oge, %26, %27 : vector<2x16x32xf32>
      %cst_16 = arith.constant 2.000000e-01 : f32
      %29 = vector.broadcast %cst_16 : f32 to vector<2x16x32xf32>
      %30 = arith.mulf %29, %26 : vector<2x16x32xf32>
      %31 = arith.select %28, %26, %30 : vector<2x16x32xi1>, vector<2x16x32xf32>
      %cst_17 = arith.constant dense<0.000000e+00> : vector<2x32xf32>
      %32 = vector.multi_reduction <add>, %31, %cst_17 [1] : vector<2x16x32xf32> to vector<2x32xf32>
      %33 = vector.shape_cast %32 : vector<2x32xf32> to vector<2x1x32xf32>
      %cst_18 = arith.constant 1.600000e+01 : f32
      %34 = vector.broadcast %cst_18 : f32 to vector<2x1x32xf32>
      %35 = arith.divf %33, %34 : vector<2x1x32xf32>
      %36 = vector.broadcast %35 : vector<2x1x32xf32> to vector<2x16x32xf32>
      %37 = arith.subf %31, %36 : vector<2x16x32xf32>
      %38 = vector.broadcast %35 : vector<2x1x32xf32> to vector<2x16x32xf32>
      %39 = arith.subf %31, %38 : vector<2x16x32xf32>
      %40 = arith.mulf %37, %39 : vector<2x16x32xf32>
      %cst_19 = arith.constant dense<0.000000e+00> : vector<2x32xf32>
      %41 = vector.multi_reduction <add>, %40, %cst_19 [1] : vector<2x16x32xf32> to vector<2x32xf32>
      %42 = vector.shape_cast %41 : vector<2x32xf32> to vector<2x1x32xf32>
      %cst_20 = arith.constant 1.600000e+01 : f32
      %43 = vector.broadcast %cst_20 : f32 to vector<2x1x32xf32>
      %44 = arith.divf %42, %43 : vector<2x1x32xf32>
      %45 = vector.broadcast %35 : vector<2x1x32xf32> to vector<2x16x32xf32>
      %46 = arith.subf %31, %45 : vector<2x16x32xf32>
      %cst_21 = arith.constant 9.99999974E-6 : f32
      %47 = vector.broadcast %cst_21 : f32 to vector<2x1x32xf32>
      %48 = arith.addf %44, %47 : vector<2x1x32xf32>
      %49 = math.rsqrt %48 : vector<2x1x32xf32>
      %50 = vector.broadcast %49 : vector<2x1x32xf32> to vector<2x16x32xf32>
      %51 = arith.mulf %46, %50 : vector<2x16x32xf32>
      %c0_22 = arith.constant 0 : index
      %c0_23 = arith.constant 0 : index
      %52 = vector.load %arg17[%c0_22, %c0_23] : memref<2x32xf32, #tpu.memory_space<vmem>>, vector<2x32xf32>
      %cst_24 = arith.constant 2.500000e-01 : f32
      %53 = vector.broadcast %cst_24 : f32 to vector<2x32xf32>
      %54 = arith.mulf %52, %53 : vector<2x32xf32>
      %55 = arith.truncf %54 : vector<2x32xf32> to vector<2x32xbf16>
      %c0_25 = arith.constant 0 : index
      %c0_26 = arith.constant 0 : index
      %c0_27 = arith.constant 0 : index
      %56 = vector.load %arg7[%c0_25, %c0_26, %c0_27] : memref<1x32x64xbf16, #tpu.memory_space<vmem>>, vector<1x32x64xbf16>
      %57 = vector.shape_cast %56 : vector<1x32x64xbf16> to vector<32x64xbf16>
      %cst_28 = arith.constant dense<0.000000e+00> : vector<2x64xf32>
      %58 = tpu.matmul %55, %57, %cst_28 {dimension_numbers = #tpu.dot_dimension_numbers<[1], [0], [0], [1], [0, 0, 1, 1], [], []>} : vector<2x32xbf16>, vector<32x64xbf16>, vector<2x64xf32> -> vector<2x64xf32>
      %c0_29 = arith.constant 0 : index
      %c0_30 = arith.constant 0 : index
      %c0_31 = arith.constant 0 : index
      %59 = vector.load %arg8[%c0_29, %c0_30, %c0_31] : memref<2x1x64xf32, #tpu.memory_space<vmem>>, vector<1x1x64xf32>
      %60 = vector.shape_cast %59 : vector<1x1x64xf32> to vector<1x64xf32>
      %61 = vector.broadcast %60 : vector<1x64xf32> to vector<2x64xf32>
      %62 = arith.addf %58, %61 : vector<2x64xf32>
      %63 = vector.extract_strided_slice %62 {offsets = [0, 0], sizes = [2, 32], strides = [1, 1]} : vector<2x64xf32> to vector<2x32xf32>
      %64 = vector.extract_strided_slice %62 {offsets = [0, 32], sizes = [2, 32], strides = [1, 1]} : vector<2x64xf32> to vector<2x32xf32>
      %65 = vector.shape_cast %63 : vector<2x32xf32> to vector<2x1x32xf32>
      %66 = vector.broadcast %65 : vector<2x1x32xf32> to vector<2x16x32xf32>
      %67 = arith.mulf %66, %51 : vector<2x16x32xf32>
      %68 = vector.shape_cast %64 : vector<2x32xf32> to vector<2x1x32xf32>
      %69 = vector.broadcast %68 : vector<2x1x32xf32> to vector<2x16x32xf32>
      %70 = arith.addf %67, %69 : vector<2x16x32xf32>
      %cst_32 = arith.constant 0.000000e+00 : f32
      %71 = vector.broadcast %cst_32 : f32 to vector<2x8x32xf32>
      %c0_33 = arith.constant 0 : index
      %c0_34 = arith.constant 0 : index
      %c0_35 = arith.constant 0 : index
      %72 = vector.load %arg18[%c0_33, %c0_34, %c0_35] : memref<2x32x32xf32, #tpu.memory_space<vmem>>, vector<2x8x32xf32>
      tpu.vector_store %arg18[%c0_33, %c0_34, %c0_35], %71 {strides = array<i32>} : memref<2x32x32xf32, #tpu.memory_space<vmem>>, vector<2x8x32xf32>,
      %cst_36 = arith.constant 0.000000e+00 : f32
      %73 = vector.broadcast %cst_36 : f32 to vector<2x8x32xf32>
      %c0_37 = arith.constant 0 : index
      %c24 = arith.constant 24 : index
      %c0_38 = arith.constant 0 : index
      %74 = vector.load %arg18[%c0_37, %c24, %c0_38] : memref<2x32x32xf32, #tpu.memory_space<vmem>>, vector<2x8x32xf32>
      tpu.vector_store %arg18[%c0_37, %c24, %c0_38], %73 {strides = array<i32>} : memref<2x32x32xf32, #tpu.memory_space<vmem>>, vector<2x8x32xf32>,
      %cst_39 = arith.constant 0.0833333358 : f32
      %75 = vector.broadcast %cst_39 : f32 to vector<2x16x32xf32>
      %76 = arith.mulf %70, %75 : vector<2x16x32xf32>
      %c0_40 = arith.constant 0 : index
      %c8 = arith.constant 8 : index
      %c0_41 = arith.constant 0 : index
      %77 = vector.load %arg18[%c0_40, %c8, %c0_41] : memref<2x32x32xf32, #tpu.memory_space<vmem>>, vector<2x16x32xf32>
      tpu.vector_store %arg18[%c0_40, %c8, %c0_41], %76 {strides = array<i32>} : memref<2x32x32xf32, #tpu.memory_space<vmem>>, vector<2x16x32xf32>,
      %c0_42 = arith.constant 0 : index
      %c3 = arith.constant 3 : index
      %c0_43 = arith.constant 0 : index
      %78 = vector.load %arg18[%c0_42, %c3, %c0_43] : memref<2x32x32xf32, #tpu.memory_space<vmem>>, vector<2x16x32xf32>
      %c0_44 = arith.constant 0 : index
      %c0_45 = arith.constant 0 : index
      %c0_46 = arith.constant 0 : index
      %79 = vector.load %arg11[%c0_44, %c0_45, %c0_46] : memref<2x16x1xf32, #tpu.memory_space<vmem>>, vector<1x16x1xf32>
      %80 = vector.shape_cast %79 : vector<1x16x1xf32> to vector<16x1xf32>
      %81 = vector.shape_cast %80 : vector<16x1xf32> to vector<1x16x1xf32>
      %82 = vector.broadcast %81 : vector<1x16x1xf32> to vector<2x16x32xf32>
      %83 = arith.mulf %78, %82 : vector<2x16x32xf32>
      %84 = arith.truncf %83 : vector<2x16x32xf32> to vector<2x16x32xbf16>
      %85 = vector.shape_cast %84 : vector<2x16x32xbf16> to vector<32x32xbf16>
      %c0_47 = arith.constant 0 : index
      %c0_48 = arith.constant 0 : index
      %c0_49 = arith.constant 0 : index
      %86 = vector.load %arg19[%c0_47, %c0_48, %c0_49] : memref<9x32x32xbf16, #tpu.memory_space<vmem>>, vector<1x32x32xbf16>
      %87 = vector.shape_cast %86 : vector<1x32x32xbf16> to vector<32x32xbf16>
      %88 = vector.shape_cast %85 : vector<32x32xbf16> to vector<1x32x32xbf16>
      tpu.vector_store %arg19[%c0_47, %c0_48, %c0_49], %88 {strides = array<i32>} : memref<9x32x32xbf16, #tpu.memory_space<vmem>>, vector<1x32x32xbf16>,
      %c0_50 = arith.constant 0 : index
      %c4 = arith.constant 4 : index
      %c0_51 = arith.constant 0 : index
      %89 = vector.load %arg18[%c0_50, %c4, %c0_51] : memref<2x32x32xf32, #tpu.memory_space<vmem>>, vector<2x16x32xf32>
      %90 = arith.truncf %89 : vector<2x16x32xf32> to vector<2x16x32xbf16>
      %91 = vector.shape_cast %90 : vector<2x16x32xbf16> to vector<32x32xbf16>
      %c1 = arith.constant 1 : index
      %c0_52 = arith.constant 0 : index
      %c0_53 = arith.constant 0 : index
      %92 = vector.load %arg19[%c1, %c0_52, %c0_53] : memref<9x32x32xbf16, #tpu.memory_space<vmem>>, vector<1x32x32xbf16>
      %93 = vector.shape_cast %92 : vector<1x32x32xbf16> to vector<32x32xbf16>
      %94 = vector.shape_cast %91 : vector<32x32xbf16> to vector<1x32x32xbf16>
      tpu.vector_store %arg19[%c1, %c0_52, %c0_53], %94 {strides = array<i32>} : memref<9x32x32xbf16, #tpu.memory_space<vmem>>, vector<1x32x32xbf16>,
      %c0_54 = arith.constant 0 : index
      %c5 = arith.constant 5 : index
      %c0_55 = arith.constant 0 : index
      %95 = vector.load %arg18[%c0_54, %c5, %c0_55] : memref<2x32x32xf32, #tpu.memory_space<vmem>>, vector<2x16x32xf32>
      %c1_56 = arith.constant 1 : index
      %c0_57 = arith.constant 0 : index
      %c0_58 = arith.constant 0 : index
      %96 = vector.load %arg11[%c1_56, %c0_57, %c0_58] : memref<2x16x1xf32, #tpu.memory_space<vmem>>, vector<1x16x1xf32>
      %97 = vector.shape_cast %96 : vector<1x16x1xf32> to vector<16x1xf32>
      %98 = vector.shape_cast %97 : vector<16x1xf32> to vector<1x16x1xf32>
      %99 = vector.broadcast %98 : vector<1x16x1xf32> to vector<2x16x32xf32>
      %100 = arith.mulf %95, %99 : vector<2x16x32xf32>
      %101 = arith.truncf %100 : vector<2x16x32xf32> to vector<2x16x32xbf16>
      %102 = vector.shape_cast %101 : vector<2x16x32xbf16> to vector<32x32xbf16>
      %c2 = arith.constant 2 : index
      %c0_59 = arith.constant 0 : index
      %c0_60 = arith.constant 0 : index
      %103 = vector.load %arg19[%c2, %c0_59, %c0_60] : memref<9x32x32xbf16, #tpu.memory_space<vmem>>, vector<1x32x32xbf16>
      %104 = vector.shape_cast %103 : vector<1x32x32xbf16> to vector<32x32xbf16>
      %105 = vector.shape_cast %102 : vector<32x32xbf16> to vector<1x32x32xbf16>
      tpu.vector_store %arg19[%c2, %c0_59, %c0_60], %105 {strides = array<i32>} : memref<9x32x32xbf16, #tpu.memory_space<vmem>>, vector<1x32x32xbf16>,
      %c0_61 = arith.constant 0 : index
      %c7 = arith.constant 7 : index
      %c0_62 = arith.constant 0 : index
      %106 = vector.load %arg18[%c0_61, %c7, %c0_62] : memref<2x32x32xf32, #tpu.memory_space<vmem>>, vector<2x16x32xf32>
      %c0_63 = arith.constant 0 : index
      %c0_64 = arith.constant 0 : index
      %c0_65 = arith.constant 0 : index
      %107 = vector.load %arg11[%c0_63, %c0_64, %c0_65] : memref<2x16x1xf32, #tpu.memory_space<vmem>>, vector<1x16x1xf32>
      %108 = vector.shape_cast %107 : vector<1x16x1xf32> to vector<16x1xf32>
      %109 = vector.shape_cast %108 : vector<16x1xf32> to vector<1x16x1xf32>
      %110 = vector.broadcast %109 : vector<1x16x1xf32> to vector<2x16x32xf32>
      %111 = arith.mulf %106, %110 : vector<2x16x32xf32>
      %112 = arith.truncf %111 : vector<2x16x32xf32> to vector<2x16x32xbf16>
      %113 = vector.shape_cast %112 : vector<2x16x32xbf16> to vector<32x32xbf16>
      %c3_66 = arith.constant 3 : index
      %c0_67 = arith.constant 0 : index
      %c0_68 = arith.constant 0 : index
      %114 = vector.load %arg19[%c3_66, %c0_67, %c0_68] : memref<9x32x32xbf16, #tpu.memory_space<vmem>>, vector<1x32x32xbf16>
      %115 = vector.shape_cast %114 : vector<1x32x32xbf16> to vector<32x32xbf16>
      %116 = vector.shape_cast %113 : vector<32x32xbf16> to vector<1x32x32xbf16>
      tpu.vector_store %arg19[%c3_66, %c0_67, %c0_68], %116 {strides = array<i32>} : memref<9x32x32xbf16, #tpu.memory_space<vmem>>, vector<1x32x32xbf16>,
      %c0_69 = arith.constant 0 : index
      %c8_70 = arith.constant 8 : index
      %c0_71 = arith.constant 0 : index
      %117 = vector.load %arg18[%c0_69, %c8_70, %c0_71] : memref<2x32x32xf32, #tpu.memory_space<vmem>>, vector<2x16x32xf32>
      %118 = arith.truncf %117 : vector<2x16x32xf32> to vector<2x16x32xbf16>
      %119 = vector.shape_cast %118 : vector<2x16x32xbf16> to vector<32x32xbf16>
      %c4_72 = arith.constant 4 : index
      %c0_73 = arith.constant 0 : index
      %c0_74 = arith.constant 0 : index
      %120 = vector.load %arg19[%c4_72, %c0_73, %c0_74] : memref<9x32x32xbf16, #tpu.memory_space<vmem>>, vector<1x32x32xbf16>
      %121 = vector.shape_cast %120 : vector<1x32x32xbf16> to vector<32x32xbf16>
      %122 = vector.shape_cast %119 : vector<32x32xbf16> to vector<1x32x32xbf16>
      tpu.vector_store %arg19[%c4_72, %c0_73, %c0_74], %122 {strides = array<i32>} : memref<9x32x32xbf16, #tpu.memory_space<vmem>>, vector<1x32x32xbf16>,
      %c0_75 = arith.constant 0 : index
      %c9 = arith.constant 9 : index
      %c0_76 = arith.constant 0 : index
      %123 = vector.load %arg18[%c0_75, %c9, %c0_76] : memref<2x32x32xf32, #tpu.memory_space<vmem>>, vector<2x16x32xf32>
      %c1_77 = arith.constant 1 : index
      %c0_78 = arith.constant 0 : index
      %c0_79 = arith.constant 0 : index
      %124 = vector.load %arg11[%c1_77, %c0_78, %c0_79] : memref<2x16x1xf32, #tpu.memory_space<vmem>>, vector<1x16x1xf32>
      %125 = vector.shape_cast %124 : vector<1x16x1xf32> to vector<16x1xf32>
      %126 = vector.shape_cast %125 : vector<16x1xf32> to vector<1x16x1xf32>
      %127 = vector.broadcast %126 : vector<1x16x1xf32> to vector<2x16x32xf32>
      %128 = arith.mulf %123, %127 : vector<2x16x32xf32>
      %129 = arith.truncf %128 : vector<2x16x32xf32> to vector<2x16x32xbf16>
      %130 = vector.shape_cast %129 : vector<2x16x32xbf16> to vector<32x32xbf16>
      %c5_80 = arith.constant 5 : index
      %c0_81 = arith.constant 0 : index
      %c0_82 = arith.constant 0 : index
      %131 = vector.load %arg19[%c5_80, %c0_81, %c0_82] : memref<9x32x32xbf16, #tpu.memory_space<vmem>>, vector<1x32x32xbf16>
      %132 = vector.shape_cast %131 : vector<1x32x32xbf16> to vector<32x32xbf16>
      %133 = vector.shape_cast %130 : vector<32x32xbf16> to vector<1x32x32xbf16>
      tpu.vector_store %arg19[%c5_80, %c0_81, %c0_82], %133 {strides = array<i32>} : memref<9x32x32xbf16, #tpu.memory_space<vmem>>, vector<1x32x32xbf16>,
      %c0_83 = arith.constant 0 : index
      %c11 = arith.constant 11 : index
      %c0_84 = arith.constant 0 : index
      %134 = vector.load %arg18[%c0_83, %c11, %c0_84] : memref<2x32x32xf32, #tpu.memory_space<vmem>>, vector<2x16x32xf32>
      %c0_85 = arith.constant 0 : index
      %c0_86 = arith.constant 0 : index
      %c0_87 = arith.constant 0 : index
      %135 = vector.load %arg11[%c0_85, %c0_86, %c0_87] : memref<2x16x1xf32, #tpu.memory_space<vmem>>, vector<1x16x1xf32>
      %136 = vector.shape_cast %135 : vector<1x16x1xf32> to vector<16x1xf32>
      %137 = vector.shape_cast %136 : vector<16x1xf32> to vector<1x16x1xf32>
      %138 = vector.broadcast %137 : vector<1x16x1xf32> to vector<2x16x32xf32>
      %139 = arith.mulf %134, %138 : vector<2x16x32xf32>
      %140 = arith.truncf %139 : vector<2x16x32xf32> to vector<2x16x32xbf16>
      %141 = vector.shape_cast %140 : vector<2x16x32xbf16> to vector<32x32xbf16>
      %c6 = arith.constant 6 : index
      %c0_88 = arith.constant 0 : index
      %c0_89 = arith.constant 0 : index
      %142 = vector.load %arg19[%c6, %c0_88, %c0_89] : memref<9x32x32xbf16, #tpu.memory_space<vmem>>, vector<1x32x32xbf16>
      %143 = vector.shape_cast %142 : vector<1x32x32xbf16> to vector<32x32xbf16>
      %144 = vector.shape_cast %141 : vector<32x32xbf16> to vector<1x32x32xbf16>
      tpu.vector_store %arg19[%c6, %c0_88, %c0_89], %144 {strides = array<i32>} : memref<9x32x32xbf16, #tpu.memory_space<vmem>>, vector<1x32x32xbf16>,
      %c0_90 = arith.constant 0 : index
      %c12 = arith.constant 12 : index
      %c0_91 = arith.constant 0 : index
      %145 = vector.load %arg18[%c0_90, %c12, %c0_91] : memref<2x32x32xf32, #tpu.memory_space<vmem>>, vector<2x16x32xf32>
      %146 = arith.truncf %145 : vector<2x16x32xf32> to vector<2x16x32xbf16>
      %147 = vector.shape_cast %146 : vector<2x16x32xbf16> to vector<32x32xbf16>
      %c7_92 = arith.constant 7 : index
      %c0_93 = arith.constant 0 : index
      %c0_94 = arith.constant 0 : index
      %148 = vector.load %arg19[%c7_92, %c0_93, %c0_94] : memref<9x32x32xbf16, #tpu.memory_space<vmem>>, vector<1x32x32xbf16>
      %149 = vector.shape_cast %148 : vector<1x32x32xbf16> to vector<32x32xbf16>
      %150 = vector.shape_cast %147 : vector<32x32xbf16> to vector<1x32x32xbf16>
      tpu.vector_store %arg19[%c7_92, %c0_93, %c0_94], %150 {strides = array<i32>} : memref<9x32x32xbf16, #tpu.memory_space<vmem>>, vector<1x32x32xbf16>,
      %c0_95 = arith.constant 0 : index
      %c13 = arith.constant 13 : index
      %c0_96 = arith.constant 0 : index
      %151 = vector.load %arg18[%c0_95, %c13, %c0_96] : memref<2x32x32xf32, #tpu.memory_space<vmem>>, vector<2x16x32xf32>
      %c1_97 = arith.constant 1 : index
      %c0_98 = arith.constant 0 : index
      %c0_99 = arith.constant 0 : index
      %152 = vector.load %arg11[%c1_97, %c0_98, %c0_99] : memref<2x16x1xf32, #tpu.memory_space<vmem>>, vector<1x16x1xf32>
      %153 = vector.shape_cast %152 : vector<1x16x1xf32> to vector<16x1xf32>
      %154 = vector.shape_cast %153 : vector<16x1xf32> to vector<1x16x1xf32>
      %155 = vector.broadcast %154 : vector<1x16x1xf32> to vector<2x16x32xf32>
      %156 = arith.mulf %151, %155 : vector<2x16x32xf32>
      %157 = arith.truncf %156 : vector<2x16x32xf32> to vector<2x16x32xbf16>
      %158 = vector.shape_cast %157 : vector<2x16x32xbf16> to vector<32x32xbf16>
      %c8_100 = arith.constant 8 : index
      %c0_101 = arith.constant 0 : index
      %c0_102 = arith.constant 0 : index
      %159 = vector.load %arg19[%c8_100, %c0_101, %c0_102] : memref<9x32x32xbf16, #tpu.memory_space<vmem>>, vector<1x32x32xbf16>
      %160 = vector.shape_cast %159 : vector<1x32x32xbf16> to vector<32x32xbf16>
      %161 = vector.shape_cast %158 : vector<32x32xbf16> to vector<1x32x32xbf16>
      tpu.vector_store %arg19[%c8_100, %c0_101, %c0_102], %161 {strides = array<i32>} : memref<9x32x32xbf16, #tpu.memory_space<vmem>>, vector<1x32x32xbf16>,
      %cst_103 = arith.constant 0.000000e+00 : f32
      %162 = vector.broadcast %cst_103 : f32 to vector<32x32xf32>
      %c0_104 = arith.constant 0 : index
      %c0_105 = arith.constant 0 : index
      %163 = vector.load %arg20[%c0_104, %c0_105] : memref<32x32xf32, #tpu.memory_space<vmem>>, vector<32x32xf32>
      tpu.vector_store %arg20[%c0_104, %c0_105], %162 {strides = array<i32>} : memref<32x32xf32, #tpu.memory_space<vmem>>, vector<32x32xf32>,
    } else {
    }
    %c9_i32 = arith.constant 9 : i32
    %9 = arith.cmpi sge, %arg0, %c9_i32 : i32
    %c17_i32 = arith.constant 17 : i32
    %10 = arith.cmpi sle, %arg0, %c17_i32 : i32
    %11 = arith.andi %9, %10 : i1
    %12 = arith.extui %11 : i1 to i32
    %c0_i32_4 = arith.constant 0 : i32
    %13 = arith.cmpi ne, %12, %c0_i32_4 : i32
    scf.if %13 {
      %c9_i32_6 = arith.constant 9 : i32
      %17 = arith.subi %arg0, %c9_i32_6 : i32
      %c0_i32_7 = arith.constant 0 : i32
      %18 = arith.maxsi %17, %c0_i32_7 : i32
      %c0 = arith.constant 0 : index
      %c0_8 = arith.constant 0 : index
      %19 = vector.load %arg20[%c0, %c0_8] : memref<32x32xf32, #tpu.memory_space<vmem>>, vector<32x32xf32>
      %20 = arith.index_cast %18 : i32 to index
      %c0_9 = arith.constant 0 : index
      %c0_10 = arith.constant 0 : index
      %21 = vector.load %arg19[%20, %c0_9, %c0_10] : memref<9x32x32xbf16, #tpu.memory_space<vmem>>, vector<1x32x32xbf16>
      %22 = vector.shape_cast %21 : vector<1x32x32xbf16> to vector<32x32xbf16>
      %c0_11 = arith.constant 0 : index
      %c0_12 = arith.constant 0 : index
      %c0_13 = arith.constant 0 : index
      %23 = vector.load %arg9[%c0_11, %c0_12, %c0_13] : memref<1x32x32xbf16, #tpu.memory_space<vmem>>, vector<1x32x32xbf16>
      %24 = vector.shape_cast %23 : vector<1x32x32xbf16> to vector<32x32xbf16>
      %cst = arith.constant dense<0.000000e+00> : vector<32x32xf32>
      %25 = tpu.matmul %22, %24, %cst {dimension_numbers = #tpu.dot_dimension_numbers<[1], [0], [0], [1], [0, 0, 1, 1], [], []>} : vector<32x32xbf16>, vector<32x32xbf16>, vector<32x32xf32> -> vector<32x32xf32>
      %26 = arith.addf %19, %25 : vector<32x32xf32>
      %c0_14 = arith.constant 0 : index
      %c0_15 = arith.constant 0 : index
      %27 = vector.load %arg20[%c0_14, %c0_15] : memref<32x32xf32, #tpu.memory_space<vmem>>, vector<32x32xf32>
      tpu.vector_store %arg20[%c0_14, %c0_15], %26 {strides = array<i32>} : memref<32x32xf32, #tpu.memory_space<vmem>>, vector<32x32xf32>,
    } else {
    }
    %c18_i32 = arith.constant 18 : i32
    %14 = arith.cmpi eq, %arg0, %c18_i32 : i32
    %15 = arith.extui %14 : i1 to i32
    %c0_i32_5 = arith.constant 0 : i32
    %16 = arith.cmpi ne, %15, %c0_i32_5 : i32
    scf.if %16 {
      %c0 = arith.constant 0 : index
      %c0_6 = arith.constant 0 : index
      %17 = vector.load %arg20[%c0, %c0_6] : memref<32x32xf32, #tpu.memory_space<vmem>>, vector<32x32xf32>
      %18 = vector.shape_cast %17 : vector<32x32xf32> to vector<2x16x32xf32>
      %c0_7 = arith.constant 0 : index
      %c0_8 = arith.constant 0 : index
      %19 = vector.load %arg10[%c0_7, %c0_8] : memref<1x32xf32, #tpu.memory_space<vmem>>, vector<1x32xf32>
      %20 = vector.shape_cast %19 : vector<1x32xf32> to vector<1x1x32xf32>
      %21 = vector.broadcast %20 : vector<1x1x32xf32> to vector<2x16x32xf32>
      %22 = arith.addf %18, %21 : vector<2x16x32xf32>
      %c1 = arith.constant 1 : index
      %c0_9 = arith.constant 0 : index
      %c0_10 = arith.constant 0 : index
      %c0_11 = arith.constant 0 : index
      %23 = vector.load %arg6[%c1, %c0_9, %c0_10, %c0_11] : memref<2x1x1x32xf32, #tpu.memory_space<vmem>>, vector<1x1x1x32xf32>
      %24 = vector.shape_cast %23 : vector<1x1x1x32xf32> to vector<1x1x32xf32>
      %c1_12 = arith.constant 1 : index
      %c0_13 = arith.constant 0 : index
      %c0_14 = arith.constant 0 : index
      %c0_15 = arith.constant 0 : index
      %25 = vector.load %arg5[%c1_12, %c0_13, %c0_14, %c0_15] : memref<2x2x16x1xf32, #tpu.memory_space<vmem>>, vector<1x2x16x1xf32>
      %26 = vector.shape_cast %25 : vector<1x2x16x1xf32> to vector<2x16x1xf32>
      %27 = vector.broadcast %24 : vector<1x1x32xf32> to vector<2x16x32xf32>
      %28 = vector.broadcast %26 : vector<2x16x1xf32> to vector<2x16x32xf32>
      %29 = arith.mulf %27, %28 : vector<2x16x32xf32>
      %30 = arith.addf %22, %29 : vector<2x16x32xf32>
      %cst = arith.constant 0.000000e+00 : f32
      %31 = vector.broadcast %cst : f32 to vector<2x16x32xf32>
      %32 = arith.cmpf oge, %30, %31 : vector<2x16x32xf32>
      %cst_16 = arith.constant 2.000000e-01 : f32
      %33 = vector.broadcast %cst_16 : f32 to vector<2x16x32xf32>
      %34 = arith.mulf %33, %30 : vector<2x16x32xf32>
      %35 = arith.select %32, %30, %34 : vector<2x16x32xi1>, vector<2x16x32xf32>
      %cst_17 = arith.constant dense<0.000000e+00> : vector<2x32xf32>
      %36 = vector.multi_reduction <add>, %35, %cst_17 [1] : vector<2x16x32xf32> to vector<2x32xf32>
      %37 = vector.shape_cast %36 : vector<2x32xf32> to vector<2x1x32xf32>
      %cst_18 = arith.constant 1.600000e+01 : f32
      %38 = vector.broadcast %cst_18 : f32 to vector<2x1x32xf32>
      %39 = arith.divf %37, %38 : vector<2x1x32xf32>
      %40 = vector.broadcast %39 : vector<2x1x32xf32> to vector<2x16x32xf32>
      %41 = arith.subf %35, %40 : vector<2x16x32xf32>
      %42 = vector.broadcast %39 : vector<2x1x32xf32> to vector<2x16x32xf32>
      %43 = arith.subf %35, %42 : vector<2x16x32xf32>
      %44 = arith.mulf %41, %43 : vector<2x16x32xf32>
      %cst_19 = arith.constant dense<0.000000e+00> : vector<2x32xf32>
      %45 = vector.multi_reduction <add>, %44, %cst_19 [1] : vector<2x16x32xf32> to vector<2x32xf32>
      %46 = vector.shape_cast %45 : vector<2x32xf32> to vector<2x1x32xf32>
      %cst_20 = arith.constant 1.600000e+01 : f32
      %47 = vector.broadcast %cst_20 : f32 to vector<2x1x32xf32>
      %48 = arith.divf %46, %47 : vector<2x1x32xf32>
      %49 = vector.broadcast %39 : vector<2x1x32xf32> to vector<2x16x32xf32>
      %50 = arith.subf %35, %49 : vector<2x16x32xf32>
      %cst_21 = arith.constant 9.99999974E-6 : f32
      %51 = vector.broadcast %cst_21 : f32 to vector<2x1x32xf32>
      %52 = arith.addf %48, %51 : vector<2x1x32xf32>
      %53 = math.rsqrt %52 : vector<2x1x32xf32>
      %54 = vector.broadcast %53 : vector<2x1x32xf32> to vector<2x16x32xf32>
      %55 = arith.mulf %50, %54 : vector<2x16x32xf32>
      %c0_22 = arith.constant 0 : index
      %c0_23 = arith.constant 0 : index
      %56 = vector.load %arg17[%c0_22, %c0_23] : memref<2x32xf32, #tpu.memory_space<vmem>>, vector<2x32xf32>
      %cst_24 = arith.constant 2.500000e-01 : f32
      %57 = vector.broadcast %cst_24 : f32 to vector<2x32xf32>
      %58 = arith.mulf %56, %57 : vector<2x32xf32>
      %59 = arith.truncf %58 : vector<2x32xf32> to vector<2x32xbf16>
      %c0_25 = arith.constant 0 : index
      %c0_26 = arith.constant 0 : index
      %c0_27 = arith.constant 0 : index
      %60 = vector.load %arg7[%c0_25, %c0_26, %c0_27] : memref<1x32x64xbf16, #tpu.memory_space<vmem>>, vector<1x32x64xbf16>
      %61 = vector.shape_cast %60 : vector<1x32x64xbf16> to vector<32x64xbf16>
      %cst_28 = arith.constant dense<0.000000e+00> : vector<2x64xf32>
      %62 = tpu.matmul %59, %61, %cst_28 {dimension_numbers = #tpu.dot_dimension_numbers<[1], [0], [0], [1], [0, 0, 1, 1], [], []>} : vector<2x32xbf16>, vector<32x64xbf16>, vector<2x64xf32> -> vector<2x64xf32>
      %c1_29 = arith.constant 1 : index
      %c0_30 = arith.constant 0 : index
      %c0_31 = arith.constant 0 : index
      %63 = vector.load %arg8[%c1_29, %c0_30, %c0_31] : memref<2x1x64xf32, #tpu.memory_space<vmem>>, vector<1x1x64xf32>
      %64 = vector.shape_cast %63 : vector<1x1x64xf32> to vector<1x64xf32>
      %65 = vector.broadcast %64 : vector<1x64xf32> to vector<2x64xf32>
      %66 = arith.addf %62, %65 : vector<2x64xf32>
      %67 = vector.extract_strided_slice %66 {offsets = [0, 0], sizes = [2, 32], strides = [1, 1]} : vector<2x64xf32> to vector<2x32xf32>
      %68 = vector.extract_strided_slice %66 {offsets = [0, 32], sizes = [2, 32], strides = [1, 1]} : vector<2x64xf32> to vector<2x32xf32>
      %69 = vector.shape_cast %67 : vector<2x32xf32> to vector<2x1x32xf32>
      %70 = vector.broadcast %69 : vector<2x1x32xf32> to vector<2x16x32xf32>
      %71 = arith.mulf %70, %55 : vector<2x16x32xf32>
      %72 = vector.shape_cast %68 : vector<2x32xf32> to vector<2x1x32xf32>
      %73 = vector.broadcast %72 : vector<2x1x32xf32> to vector<2x16x32xf32>
      %74 = arith.addf %71, %73 : vector<2x16x32xf32>
      %cst_32 = arith.constant 2.500000e-01 : f32
      %75 = vector.broadcast %cst_32 : f32 to vector<2x16x32xf32>
      %76 = arith.mulf %74, %75 : vector<2x16x32xf32>
      %77 = arith.truncf %76 : vector<2x16x32xf32> to vector<2x16x32xbf16>
      %78 = vector.shape_cast %77 : vector<2x16x32xbf16> to vector<32x32xbf16>
      %c0_33 = arith.constant 0 : index
      %c0_34 = arith.constant 0 : index
      %79 = vector.load %arg12[%c0_33, %c0_34] : memref<32x128xbf16, #tpu.memory_space<vmem>>, vector<32x128xbf16>
      %cst_35 = arith.constant dense<0.000000e+00> : vector<32x128xf32>
      %80 = tpu.matmul %78, %79, %cst_35 {dimension_numbers = #tpu.dot_dimension_numbers<[1], [0], [0], [1], [0, 0, 1, 1], [], []>} : vector<32x32xbf16>, vector<32x128xbf16>, vector<32x128xf32> -> vector<32x128xf32>
      %c0_36 = arith.constant 0 : index
      %c0_37 = arith.constant 0 : index
      %81 = vector.load %arg13[%c0_36, %c0_37] : memref<1x128xf32, #tpu.memory_space<vmem>>, vector<1x128xf32>
      %82 = vector.broadcast %81 : vector<1x128xf32> to vector<32x128xf32>
      %83 = arith.addf %80, %82 : vector<32x128xf32>
      %cst_38 = arith.constant 0.000000e+00 : f32
      %84 = vector.broadcast %cst_38 : f32 to vector<32x128xf32>
      %85 = arith.cmpf oge, %83, %84 : vector<32x128xf32>
      %cst_39 = arith.constant 2.000000e-01 : f32
      %86 = vector.broadcast %cst_39 : f32 to vector<32x128xf32>
      %87 = arith.mulf %86, %83 : vector<32x128xf32>
      %88 = arith.select %85, %83, %87 : vector<32x128xi1>, vector<32x128xf32>
      %cst_40 = arith.constant 0.816496611 : f32
      %89 = vector.broadcast %cst_40 : f32 to vector<32x128xf32>
      %90 = arith.mulf %88, %89 : vector<32x128xf32>
      %c0_41 = arith.constant 0 : index
      %c0_42 = arith.constant 0 : index
      %91 = vector.load %arg14[%c0_41, %c0_42] : memref<128x128xf32, #tpu.memory_space<vmem>>, vector<128x128xf32>
      %cst_43 = arith.constant dense<0.000000e+00> : vector<32x128xf32>
      %92 = tpu.matmul %90, %91, %cst_43 {dimension_numbers = #tpu.dot_dimension_numbers<[1], [0], [0], [1], [0, 0, 1, 1], [], []>} : vector<32x128xf32>, vector<128x128xf32>, vector<32x128xf32> -> vector<32x128xf32>
      %c0_44 = arith.constant 0 : index
      %c0_45 = arith.constant 0 : index
      %93 = vector.load %arg15[%c0_44, %c0_45] : memref<1x128xf32, #tpu.memory_space<vmem>>, vector<1x128xf32>
      %94 = vector.broadcast %93 : vector<1x128xf32> to vector<32x128xf32>
      %95 = arith.addf %92, %94 : vector<32x128xf32>
      %cst_46 = arith.constant 0.000000e+00 : f32
      %96 = vector.broadcast %cst_46 : f32 to vector<32x128xf32>
      %97 = arith.cmpf oge, %95, %96 : vector<32x128xf32>
      %cst_47 = arith.constant 2.000000e-01 : f32
      %98 = vector.broadcast %cst_47 : f32 to vector<32x128xf32>
      %99 = arith.mulf %98, %95 : vector<32x128xf32>
      %100 = arith.select %97, %95, %99 : vector<32x128xi1>, vector<32x128xf32>
      %101 = vector.shape_cast %100 : vector<32x128xf32> to vector<2x16x128xf32>
      %c0_48 = arith.constant 0 : index
      %c0_49 = arith.constant 0 : index
      %c0_50 = arith.constant 0 : index
      %102 = vector.load %arg16[%c0_48, %c0_49, %c0_50] : memref<2x16x128xf32, #tpu.memory_space<vmem>>, vector<2x16x128xf32>
      tpu.vector_store %arg16[%c0_48, %c0_49, %c0_50], %101 {strides = array<i32>} : memref<2x16x128xf32, #tpu.memory_space<vmem>>, vector<2x16x128xf32>,
    } else {
    }
    return
  }
  func.func @transform_0(%arg0: i32) -> (i32, i32) {
    %c0_i32 = arith.constant 0 : i32
    %c0_i32_0 = arith.constant 0 : i32
    %c0_i32_1 = arith.constant 0 : i32
    return %c0_i32, %c0_i32_0 : i32, i32
  }
  func.func @transform_1(%arg0: i32) -> (i32, i32, i32) {
    %c7_i32 = arith.constant 7 : i32
    %0 = arith.minsi %arg0, %c7_i32 : i32
    %c0_i32 = arith.constant 0 : i32
    %c0_i32_0 = arith.constant 0 : i32
    %c0_i32_1 = arith.constant 0 : i32
    return %0, %c0_i32, %c0_i32_0 : i32, i32, i32
  }
  func.func @transform_2(%arg0: i32) -> (i32, i32, i32) {
    %c7_i32 = arith.constant 7 : i32
    %0 = arith.minsi %arg0, %c7_i32 : i32
    %c0_i32 = arith.constant 0 : i32
    %c0_i32_0 = arith.constant 0 : i32
    %c0_i32_1 = arith.constant 0 : i32
    return %0, %c0_i32, %c0_i32_0 : i32, i32, i32
  }
  func.func @transform_3(%arg0: i32) -> (i32, i32, i32) {
    %c0_i32 = arith.constant 0 : i32
    %c0_i32_0 = arith.constant 0 : i32
    %c0_i32_1 = arith.constant 0 : i32
    %c0_i32_2 = arith.constant 0 : i32
    return %c0_i32, %c0_i32_0, %c0_i32_1 : i32, i32, i32
  }
  func.func @transform_4(%arg0: i32) -> (i32, i32, i32, i32) {
    %c0_i32 = arith.constant 0 : i32
    %c0_i32_0 = arith.constant 0 : i32
    %c0_i32_1 = arith.constant 0 : i32
    %c0_i32_2 = arith.constant 0 : i32
    %c0_i32_3 = arith.constant 0 : i32
    return %c0_i32, %c0_i32_0, %c0_i32_1, %c0_i32_2 : i32, i32, i32, i32
  }
  func.func @transform_5(%arg0: i32) -> (i32, i32, i32, i32) {
    %c0_i32 = arith.constant 0 : i32
    %c0_i32_0 = arith.constant 0 : i32
    %c0_i32_1 = arith.constant 0 : i32
    %c0_i32_2 = arith.constant 0 : i32
    %c0_i32_3 = arith.constant 0 : i32
    return %c0_i32, %c0_i32_0, %c0_i32_1, %c0_i32_2 : i32, i32, i32, i32
  }
  func.func @transform_6(%arg0: i32) -> (i32, i32, i32) {
    %c17_i32 = arith.constant 17 : i32
    %0 = arith.subi %arg0, %c17_i32 : i32
    %c1_i32 = arith.constant 1 : i32
    %1 = arith.minsi %0, %c1_i32 : i32
    %c0_i32 = arith.constant 0 : i32
    %2 = arith.maxsi %1, %c0_i32 : i32
    %c0_i32_0 = arith.constant 0 : i32
    %c0_i32_1 = arith.constant 0 : i32
    %c0_i32_2 = arith.constant 0 : i32
    return %2, %c0_i32_0, %c0_i32_1 : i32, i32, i32
  }
  func.func @transform_7(%arg0: i32) -> (i32, i32, i32) {
    %c0_i32 = arith.constant 0 : i32
    %c0_i32_0 = arith.constant 0 : i32
    %c0_i32_1 = arith.constant 0 : i32
    %c0_i32_2 = arith.constant 0 : i32
    return %c0_i32, %c0_i32_0, %c0_i32_1 : i32, i32, i32
  }
  func.func @transform_8(%arg0: i32) -> (i32, i32, i32) {
    %c9_i32 = arith.constant 9 : i32
    %0 = arith.subi %arg0, %c9_i32 : i32
    %c8_i32 = arith.constant 8 : i32
    %1 = arith.minsi %0, %c8_i32 : i32
    %c0_i32 = arith.constant 0 : i32
    %2 = arith.maxsi %1, %c0_i32 : i32
    %c0_i32_0 = arith.constant 0 : i32
    %c0_i32_1 = arith.constant 0 : i32
    %c0_i32_2 = arith.constant 0 : i32
    return %2, %c0_i32_0, %c0_i32_1 : i32, i32, i32
  }
  func.func @transform_9(%arg0: i32) -> (i32, i32) {
    %c0_i32 = arith.constant 0 : i32
    %c0_i32_0 = arith.constant 0 : i32
    %c0_i32_1 = arith.constant 0 : i32
    return %c0_i32, %c0_i32_0 : i32, i32
  }
  func.func @transform_10(%arg0: i32) -> (i32, i32, i32) {
    %c0_i32 = arith.constant 0 : i32
    %c0_i32_0 = arith.constant 0 : i32
    %c0_i32_1 = arith.constant 0 : i32
    %c0_i32_2 = arith.constant 0 : i32
    return %c0_i32, %c0_i32_0, %c0_i32_1 : i32, i32, i32
  }
  func.func @transform_11(%arg0: i32) -> (i32, i32) {
    %c0_i32 = arith.constant 0 : i32
    %c0_i32_0 = arith.constant 0 : i32
    %c0_i32_1 = arith.constant 0 : i32
    return %c0_i32, %c0_i32_0 : i32, i32
  }
  func.func @transform_12(%arg0: i32) -> (i32, i32) {
    %c0_i32 = arith.constant 0 : i32
    %c0_i32_0 = arith.constant 0 : i32
    %c0_i32_1 = arith.constant 0 : i32
    return %c0_i32, %c0_i32_0 : i32, i32
  }
  func.func @transform_13(%arg0: i32) -> (i32, i32) {
    %c0_i32 = arith.constant 0 : i32
    %c0_i32_0 = arith.constant 0 : i32
    %c0_i32_1 = arith.constant 0 : i32
    return %c0_i32, %c0_i32_0 : i32, i32
  }
  func.func @transform_14(%arg0: i32) -> (i32, i32) {
    %c0_i32 = arith.constant 0 : i32
    %c0_i32_0 = arith.constant 0 : i32
    %c0_i32_1 = arith.constant 0 : i32
    return %c0_i32, %c0_i32_0 : i32, i32
  }
  func.func @transform_15(%arg0: i32) -> (i32, i32, i32) {
    %c0_i32 = arith.constant 0 : i32
    %c0_i32_0 = arith.constant 0 : i32
    %c0_i32_1 = arith.constant 0 : i32
    %c0_i32_2 = arith.constant 0 : i32
    return %c0_i32, %c0_i32_0, %c0_i32_1 : i32, i32, i32
  }
}

</mosaic_0001>

<llo_original>
// kernel: tpu_custom_call.1
$region0: #{tpu_custom_call.1}
  #allocation0 [shape = 'u32[]', space=smem, size = 0x4, offset = 0x4, fixed_abs, tag = 'smem constant byte address 0x4 - core index']
  #allocation1 [shape = 'u32[144,128]{1,0:T(1,128)}', space=vmem, size = 0x12000, scoped, tag = 'internal scratch']
  #allocation2 [shape = 'f32[2,32]{1,0:T(2,128)}', space=vmem, size = 0x400, scoped, tag = 'scratch operand']
  #allocation3 [shape = 'f32[2,32,32]{2,1,0:T(8,128)}', space=vmem, size = 0x8000, scoped, tag = 'scratch operand']
  #allocation4 [shape = 'bf16[9,32,32]{2,1,0:T(16,128)(2,1)}', space=vmem, size = 0x12000, scoped, tag = 'scratch operand']
  #allocation5 [shape = 'f32[32,32]{1,0:T(8,128)}', space=vmem, size = 0x4000, scoped, tag = 'scratch operand']
  %s0 = inlined_call_operand.vmem [shape: f32[2,32], index: 0, kind: input, shape index: {}]
  %s1 = inlined_call_operand.hbm [shape: bf16[8,32,32], index: 1, kind: input, shape index: {}]
  %s2 = inlined_call_operand.hbm [shape: f32[8,1,32], index: 2, kind: input, shape index: {}]
  %s3 = inlined_call_operand.vmem [shape: f32[1,16,32], index: 3, kind: input, shape index: {}]
  %s4 = inlined_call_operand.vmem [shape: f32[2,2,16,1], index: 4, kind: input, shape index: {}]
  %s5 = inlined_call_operand.vmem [shape: f32[2,1,1,32], index: 5, kind: input, shape index: {}]
  %s6 = inlined_call_operand.hbm [shape: bf16[2,32,64], index: 6, kind: input, shape index: {}]
  %s7 = inlined_call_operand.vmem [shape: f32[2,1,64], index: 7, kind: input, shape index: {}]
  %s8 = inlined_call_operand.hbm [shape: bf16[9,32,32], index: 8, kind: input, shape index: {}]
  %s9 = inlined_call_operand.vmem [shape: f32[1,32], index: 9, kind: input, shape index: {}]
  %s10 = inlined_call_operand.vmem [shape: f32[2,16,1], index: 10, kind: input, shape index: {}]
  %s11 = inlined_call_operand.hbm [shape: bf16[32,128], index: 11, kind: input, shape index: {}]
  %s12 = inlined_call_operand.hbm [shape: f32[1,128], index: 12, kind: input, shape index: {}]
  %s13 = inlined_call_operand.vmem [shape: f32[128,128], index: 13, kind: input, shape index: {}]
  %s14 = inlined_call_operand.vmem [shape: f32[1,128], index: 14, kind: input, shape index: {}]
  %s15 = inlined_call_operand.hbm [shape: f32[2,16,128], index: 15, kind: output, shape index: {}]
  %s16 = sld [smem:[#allocation0]]
  $region137: #{tpu_custom_call.1} parent=0
    _
  %s18 = ssub.s32 1, %s16
  %s19 = scalar_select 0, %s18, %s16
  $region1: #{tpu_custom_call.1} parent=0
    #allocation6 [shape = 'u8[16384]{0}', space=vmem, size = 0x4000, scoped, tag = 'input window, operand 1']
    #allocation7 [shape = 's32[2]{0}', space=sflag, size = 0x8, scoped, tag = 'scoped memory for tpu_custom_call.1']
    #allocation8 [shape = 's32[2]{0}', space=sflag, size = 0x8, scoped, tag = 'scoped memory for tpu_custom_call.1']
    #allocation9 [shape = 'u8[1024]{0}', space=vmem, size = 0x400, scoped, tag = 'input window, operand 2']
    #allocation10 [shape = 's32[2]{0}', space=sflag, size = 0x8, scoped, tag = 'scoped memory for tpu_custom_call.1']
    #allocation11 [shape = 'u8[16384]{0}', space=vmem, size = 0x4000, scoped, tag = 'input window, operand 6']
    #allocation12 [shape = 'u8[16384]{0}', space=vmem, size = 0x4000, scoped, tag = 'input window, operand 8']
    #allocation13 [shape = 's32[2]{0}', space=sflag, size = 0x8, scoped, tag = 'scoped memory for tpu_custom_call.1']
    #allocation14 [shape = 'u8[8192]{0}', space=vmem, size = 0x2000, scoped, tag = 'input window, operand 11, single buffered']
    #allocation15 [shape = 'u8[512]{0}', space=vmem, size = 0x400, scoped, tag = 'input window, operand 12, single buffered']
    #allocation16 [shape = 's32[1]{0}', space=sflag, size = 0x4, scoped, tag = 'scoped memory for tpu_custom_call.1']
    #allocation17 [shape = 'u8[16384]{0}', space=vmem, size = 0x4000, scoped, tag = 'output window, operand 0, single buffered']
    %20 = vsyncpa [#allocation7], 0
    %s21 = scalar_lea.sflag [#allocation7], 1
    %22 = vsyncpa %s21, 0
    %23 = vsyncpa [#allocation10], 0
    %s24 = scalar_lea.sflag [#allocation10], 1
    %25 = vsyncpa %s24, 0
    %26 = vsyncpa [#allocation13], 0
    %s27 = scalar_lea.sflag [#allocation13], 1
    %28 = vsyncpa %s27, 0
    %29 = vsyncpa [#allocation16], 0
    %30 = vsyncpa [#allocation8], 0
    loop: start=0, step=1, limit=21
    $region2: #{tpu_custom_call.1} parent=1 // loop_pre_header
      _
    $region3: #{tpu_custom_call.1} parent=1 // loop_header
      %s32 = sphi 0, %s36
      %p33 = scmp.ge.s32.totalorder %s32, 21
      %s40 = sphi 0, %s40
      %s42 = sphi 0, %s40
      %s43 = sphi 0, %s42
      %s57 = sphi 0, %s43
      %s67 = sphi 0, %s69
      %s70 = sphi 0, %s67
      %s71 = sphi 0, %s70
      %s87 = sphi 0, %s71
      %s97 = sphi 0, %s99
      %s100 = sphi 0, %s97
      %s101 = sphi 0, %s100
      %s117 = sphi 0, %s101
      %s121 = sphi 0, %s121
      %s123 = sphi 0, %s121
      %s124 = sphi 0, %s123
      %s138 = sphi 0, %s124
      %s142 = sphi 0, %s142
      %s144 = sphi 0, %s142
      %s145 = sphi 0, %s144
      %s159 = sphi 0, %s145
      %s163 = sphi 0, %s163
      %s165 = sphi 0, %s163
      %s166 = sphi 0, %s165
      %s180 = sphi 0, %s166
      %s196 = sphi 0, %s198
      %s199 = sphi 0, %s196
      %s200 = sphi 0, %s199
      %s216 = sphi 0, %s200
      %s220 = sphi 0, %s220
      %s222 = sphi 0, %s220
      %s223 = sphi 0, %s222
      %s237 = sphi 0, %s223
      %s253 = sphi 0, %s255
      %s256 = sphi 0, %s253
      %s257 = sphi 0, %s256
      %s273 = sphi 0, %s257
      %s277 = sphi 0, %s277
      %s279 = sphi 0, %s277
      %s280 = sphi 0, %s279
      %s294 = sphi 0, %s280
      %s298 = sphi 0, %s298
      %s300 = sphi 0, %s298
      %s301 = sphi 0, %s300
      %s315 = sphi 0, %s301
      %s319 = sphi 0, %s319
      %s321 = sphi 0, %s319
      %s322 = sphi 0, %s321
      %s336 = sphi 0, %s322
      %s340 = sphi 0, %s340
      %s342 = sphi 0, %s340
      %s343 = sphi 0, %s342
      %s357 = sphi 0, %s343
      %s361 = sphi 0, %s361
      %s363 = sphi 0, %s361
      %s364 = sphi 0, %s363
      %s378 = sphi 0, %s364
      %s382 = sphi 0, %s382
      %s384 = sphi 0, %s382
      %s385 = sphi 0, %s384
      %s399 = sphi 0, %s385
      %s403 = sphi 0, %s403
      %s405 = sphi 0, %s403
      %s406 = sphi 0, %s405
      %s420 = sphi 0, %s406
    $region4: #{tpu_custom_call.1} parent=1 // loop_header_branch
      %35 = sbr.rel (%p33) target = $region8
    $region5: #{tpu_custom_call.1} parent=1 // loop_body
      %s37 = ssub.s32 %s32, 1
      %s38 = ssub.s32 %s32, 2
      %s39 = sadd.s32 %s32, 1
      %s41 = sadd.s32 %s40, 1
      %p44 = scmp.eq.s32.totalorder %s32, 18
      %p45 = scmp.ne.s32.totalorder %s40, %s42
      %p46 = scmp.eq.s32.totalorder %s32, 0
      %p47 = por %p45, %p46
      %p48 = scmp.ne.s32.totalorder %s40, %s42
      %p49 = scmp.eq.s32.totalorder %s37, 18
      %p50 = por %p48, %p49
      %p51 = scmp.ne.s32.totalorder %s42, %s43
      %p52 = scmp.eq.s32.totalorder %s37, 0
      %p53 = por %p51, %p52
      %p54 = scmp.ne.s32.totalorder %s42, %s43
      %p55 = scmp.eq.s32.totalorder %s38, 18
      %p56 = por %p54, %p55
      %p58 = scmp.ne.s32.totalorder %s43, %s57
      %p59 = scmp.eq.s32.totalorder %s38, 0
      %p60 = por %p58, %p59
      %p61 = scmp.lt.s32.totalorder %s32, 7
      %s62 = scalar_select %p61, %s32, 7
      %p63 = scmp.lt.s32.totalorder %s39, 7
      %s64 = scalar_select %p63, %s39, 7
      %s65 = ssub.s32 %s62, %s64
      %p66 = scmp.eq.s32.totalorder %s65, 0
      %s68 = sadd.s32 %s67, 1
      %s69 = scalar_select %p66, %s67, %s68
      %p72 = pneg %p66
      %p73 = scmp.eq.s32.totalorder %s32, 18
      %p74 = por %p72, %p73
      %p75 = scmp.ne.s32.totalorder %s67, %s70
      %p76 = scmp.eq.s32.totalorder %s32, 0
      %p77 = por %p75, %p76
      %p78 = scmp.ne.s32.totalorder %s67, %s70
      %p79 = scmp.eq.s32.totalorder %s37, 18
      %p80 = por %p78, %p79
      %p81 = scmp.ne.s32.totalorder %s70, %s71
      %p82 = scmp.eq.s32.totalorder %s37, 0
      %p83 = por %p81, %p82
      %p84 = scmp.ne.s32.totalorder %s70, %s71
      %p85 = scmp.eq.s32.totalorder %s38, 18
      %p86 = por %p84, %p85
      %p88 = scmp.ne.s32.totalorder %s71, %s87
      %p89 = scmp.eq.s32.totalorder %s38, 0
      %p90 = por %p88, %p89
      %p91 = scmp.lt.s32.totalorder %s32, 7
      %s92 = scalar_select %p91, %s32, 7
      %p93 = scmp.lt.s32.totalorder %s39, 7
      %s94 = scalar_select %p93, %s39, 7
      %s95 = ssub.s32 %s92, %s94
      %p96 = scmp.eq.s32.totalorder %s95, 0
      %s98 = sadd.s32 %s97, 1
      %s99 = scalar_select %p96, %s97, %s98
      %p102 = pneg %p96
      %p103 = scmp.eq.s32.totalorder %s32, 18
      %p104 = por %p102, %p103
      %p105 = scmp.ne.s32.totalorder %s97, %s100
      %p106 = scmp.eq.s32.totalorder %s32, 0
      %p107 = por %p105, %p106
      %p108 = scmp.ne.s32.totalorder %s97, %s100
      %p109 = scmp.eq.s32.totalorder %s37, 18
      %p110 = por %p108, %p109
      %p111 = scmp.ne.s32.totalorder %s100, %s101
      %p112 = scmp.eq.s32.totalorder %s37, 0
      %p113 = por %p111, %p112
      %p114 = scmp.ne.s32.totalorder %s100, %s101
      %p115 = scmp.eq.s32.totalorder %s38, 18
      %p116 = por %p114, %p115
      %p118 = scmp.ne.s32.totalorder %s101, %s117
      %p119 = scmp.eq.s32.totalorder %s38, 0
      %p120 = por %p118, %p119
      %s122 = sadd.s32 %s121, 1
      %p125 = scmp.eq.s32.totalorder %s32, 18
      %p126 = scmp.ne.s32.totalorder %s121, %s123
      %p127 = scmp.eq.s32.totalorder %s32, 0
      %p128 = por %p126, %p127
      %p129 = scmp.ne.s32.totalorder %s121, %s123
      %p130 = scmp.eq.s32.totalorder %s37, 18
      %p131 = por %p129, %p130
      %p132 = scmp.ne.s32.totalorder %s123, %s124
      %p133 = scmp.eq.s32.totalorder %s37, 0
      %p134 = por %p132, %p133
      %p135 = scmp.ne.s32.totalorder %s123, %s124
      %p136 = scmp.eq.s32.totalorder %s38, 18
      %p137 = por %p135, %p136
      %p139 = scmp.ne.s32.totalorder %s124, %s138
      %p140 = scmp.eq.s32.totalorder %s38, 0
      %p141 = por %p139, %p140
      %s143 = sadd.s32 %s142, 1
      %p146 = scmp.eq.s32.totalorder %s32, 18
      %p147 = scmp.ne.s32.totalorder %s142, %s144
      %p148 = scmp.eq.s32.totalorder %s32, 0
      %p149 = por %p147, %p148
      %p150 = scmp.ne.s32.totalorder %s142, %s144
      %p151 = scmp.eq.s32.totalorder %s37, 18
      %p152 = por %p150, %p151
      %p153 = scmp.ne.s32.totalorder %s144, %s145
      %p154 = scmp.eq.s32.totalorder %s37, 0
      %p155 = por %p153, %p154
      %p156 = scmp.ne.s32.totalorder %s144, %s145
      %p157 = scmp.eq.s32.totalorder %s38, 18
      %p158 = por %p156, %p157
      %p160 = scmp.ne.s32.totalorder %s145, %s159
      %p161 = scmp.eq.s32.totalorder %s38, 0
      %p162 = por %p160, %p161
      %s164 = sadd.s32 %s163, 1
      %p167 = scmp.eq.s32.totalorder %s32, 18
      %p168 = scmp.ne.s32.totalorder %s163, %s165
      %p169 = scmp.eq.s32.totalorder %s32, 0
      %p170 = por %p168, %p169
      %p171 = scmp.ne.s32.totalorder %s163, %s165
      %p172 = scmp.eq.s32.totalorder %s37, 18
      %p173 = por %p171, %p172
      %p174 = scmp.ne.s32.totalorder %s165, %s166
      %p175 = scmp.eq.s32.totalorder %s37, 0
      %p176 = por %p174, %p175
      %p177 = scmp.ne.s32.totalorder %s165, %s166
      %p178 = scmp.eq.s32.totalorder %s38, 18
      %p179 = por %p177, %p178
      %p181 = scmp.ne.s32.totalorder %s166, %s180
      %p182 = scmp.eq.s32.totalorder %s38, 0
      %p183 = por %p181, %p182
      %s184 = ssub.s32 %s32, 17
      %p185 = scmp.lt.s32.totalorder %s184, 1
      %s186 = scalar_select %p185, %s184, 1
      %p187 = scmp.gt.s32.totalorder %s186, 0
      %s188 = scalar_select %p187, %s186, 0
      %s189 = ssub.s32 %s39, 17
      %p190 = scmp.lt.s32.totalorder %s189, 1
      %s191 = scalar_select %p190, %s189, 1
      %p192 = scmp.gt.s32.totalorder %s191, 0
      %s193 = scalar_select %p192, %s191, 0
      %s194 = ssub.s32 %s188, %s193
      %p195 = scmp.eq.s32.totalorder %s194, 0
      %s197 = sadd.s32 %s196, 1
      %s198 = scalar_select %p195, %s196, %s197
      %p201 = pneg %p195
      %p202 = scmp.eq.s32.totalorder %s32, 18
      %p203 = por %p201, %p202
      %p204 = scmp.ne.s32.totalorder %s196, %s199
      %p205 = scmp.eq.s32.totalorder %s32, 0
      %p206 = por %p204, %p205
      %p207 = scmp.ne.s32.totalorder %s196, %s199
      %p208 = scmp.eq.s32.totalorder %s37, 18
      %p209 = por %p207, %p208
      %p210 = scmp.ne.s32.totalorder %s199, %s200
      %p211 = scmp.eq.s32.totalorder %s37, 0
      %p212 = por %p210, %p211
      %p213 = scmp.ne.s32.totalorder %s199, %s200
      %p214 = scmp.eq.s32.totalorder %s38, 18
      %p215 = por %p213, %p214
      %p217 = scmp.ne.s32.totalorder %s200, %s216
      %p218 = scmp.eq.s32.totalorder %s38, 0
      %p219 = por %p217, %p218
      %s221 = sadd.s32 %s220, 1
      %p224 = scmp.eq.s32.totalorder %s32, 18
      %p225 = scmp.ne.s32.totalorder %s220, %s222
      %p226 = scmp.eq.s32.totalorder %s32, 0
      %p227 = por %p225, %p226
      %p228 = scmp.ne.s32.totalorder %s220, %s222
      %p229 = scmp.eq.s32.totalorder %s37, 18
      %p230 = por %p228, %p229
      %p231 = scmp.ne.s32.totalorder %s222, %s223
      %p232 = scmp.eq.s32.totalorder %s37, 0
      %p233 = por %p231, %p232
      %p234 = scmp.ne.s32.totalorder %s222, %s223
      %p235 = scmp.eq.s32.totalorder %s38, 18
      %p236 = por %p234, %p235
      %p238 = scmp.ne.s32.totalorder %s223, %s237
      %p239 = scmp.eq.s32.totalorder %s38, 0
      %p240 = por %p238, %p239
      %s241 = ssub.s32 %s32, 9
      %p242 = scmp.lt.s32.totalorder %s241, 8
      %s243 = scalar_select %p242, %s241, 8
      %p244 = scmp.gt.s32.totalorder %s243, 0
      %s245 = scalar_select %p244, %s243, 0
      %s246 = ssub.s32 %s39, 9
      %p247 = scmp.lt.s32.totalorder %s246, 8
      %s248 = scalar_select %p247, %s246, 8
      %p249 = scmp.gt.s32.totalorder %s248, 0
      %s250 = scalar_select %p249, %s248, 0
      %s251 = ssub.s32 %s245, %s250
      %p252 = scmp.eq.s32.totalorder %s251, 0
      %s254 = sadd.s32 %s253, 1
      %s255 = scalar_select %p252, %s253, %s254
      %p258 = pneg %p252
      %p259 = scmp.eq.s32.totalorder %s32, 18
      %p260 = por %p258, %p259
      %p261 = scmp.ne.s32.totalorder %s253, %s256
      %p262 = scmp.eq.s32.totalorder %s32, 0
      %p263 = por %p261, %p262
      %p264 = scmp.ne.s32.totalorder %s253, %s256
      %p265 = scmp.eq.s32.totalorder %s37, 18
      %p266 = por %p264, %p265
      %p267 = scmp.ne.s32.totalorder %s256, %s257
      %p268 = scmp.eq.s32.totalorder %s37, 0
      %p269 = por %p267, %p268
      %p270 = scmp.ne.s32.totalorder %s256, %s257
      %p271 = scmp.eq.s32.totalorder %s38, 18
      %p272 = por %p270, %p271
      %p274 = scmp.ne.s32.totalorder %s257, %s273
      %p275 = scmp.eq.s32.totalorder %s38, 0
      %p276 = por %p274, %p275
      %s278 = sadd.s32 %s277, 1
      %p281 = scmp.eq.s32.totalorder %s32, 18
      %p282 = scmp.ne.s32.totalorder %s277, %s279
      %p283 = scmp.eq.s32.totalorder %s32, 0
      %p284 = por %p282, %p283
      %p285 = scmp.ne.s32.totalorder %s277, %s279
      %p286 = scmp.eq.s32.totalorder %s37, 18
      %p287 = por %p285, %p286
      %p288 = scmp.ne.s32.totalorder %s279, %s280
      %p289 = scmp.eq.s32.totalorder %s37, 0
      %p290 = por %p288, %p289
      %p291 = scmp.ne.s32.totalorder %s279, %s280
      %p292 = scmp.eq.s32.totalorder %s38, 18
      %p293 = por %p291, %p292
      %p295 = scmp.ne.s32.totalorder %s280, %s294
      %p296 = scmp.eq.s32.totalorder %s38, 0
      %p297 = por %p295, %p296
      %s299 = sadd.s32 %s298, 1
      %p302 = scmp.eq.s32.totalorder %s32, 18
      %p303 = scmp.ne.s32.totalorder %s298, %s300
      %p304 = scmp.eq.s32.totalorder %s32, 0
      %p305 = por %p303, %p304
      %p306 = scmp.ne.s32.totalorder %s298, %s300
      %p307 = scmp.eq.s32.totalorder %s37, 18
      %p308 = por %p306, %p307
      %p309 = scmp.ne.s32.totalorder %s300, %s301
      %p310 = scmp.eq.s32.totalorder %s37, 0
      %p311 = por %p309, %p310
      %p312 = scmp.ne.s32.totalorder %s300, %s301
      %p313 = scmp.eq.s32.totalorder %s38, 18
      %p314 = por %p312, %p313
      %p316 = scmp.ne.s32.totalorder %s301, %s315
      %p317 = scmp.eq.s32.totalorder %s38, 0
      %p318 = por %p316, %p317
      %s320 = sadd.s32 %s319, 1
      %p323 = scmp.eq.s32.totalorder %s32, 18
      %p324 = scmp.ne.s32.totalorder %s319, %s321
      %p325 = scmp.eq.s32.totalorder %s32, 0
      %p326 = por %p324, %p325
      %p327 = scmp.ne.s32.totalorder %s319, %s321
      %p328 = scmp.eq.s32.totalorder %s37, 18
      %p329 = por %p327, %p328
      %p330 = scmp.ne.s32.totalorder %s321, %s322
      %p331 = scmp.eq.s32.totalorder %s37, 0
      %p332 = por %p330, %p331
      %p333 = scmp.ne.s32.totalorder %s321, %s322
      %p334 = scmp.eq.s32.totalorder %s38, 18
      %p335 = por %p333, %p334
      %p337 = scmp.ne.s32.totalorder %s322, %s336
      %p338 = scmp.eq.s32.totalorder %s38, 0
      %p339 = por %p337, %p338
      %s341 = sadd.s32 %s340, 1
      %p344 = scmp.eq.s32.totalorder %s32, 18
      %p345 = scmp.ne.s32.totalorder %s340, %s342
      %p346 = scmp.eq.s32.totalorder %s32, 0
      %p347 = por %p345, %p346
      %p348 = scmp.ne.s32.totalorder %s340, %s342
      %p349 = scmp.eq.s32.totalorder %s37, 18
      %p350 = por %p348, %p349
      %p351 = scmp.ne.s32.totalorder %s342, %s343
      %p352 = scmp.eq.s32.totalorder %s37, 0
      %p353 = por %p351, %p352
      %p354 = scmp.ne.s32.totalorder %s342, %s343
      %p355 = scmp.eq.s32.totalorder %s38, 18
      %p356 = por %p354, %p355
      %p358 = scmp.ne.s32.totalorder %s343, %s357
      %p359 = scmp.eq.s32.totalorder %s38, 0
      %p360 = por %p358, %p359
      %s362 = sadd.s32 %s361, 1
      %p365 = scmp.eq.s32.totalorder %s32, 18
      %p366 = scmp.ne.s32.totalorder %s361, %s363
      %p367 = scmp.eq.s32.totalorder %s32, 0
      %p368 = por %p366, %p367
      %p369 = scmp.ne.s32.totalorder %s361, %s363
      %p370 = scmp.eq.s32.totalorder %s37, 18
      %p371 = por %p369, %p370
      %p372 = scmp.ne.s32.totalorder %s363, %s364
      %p373 = scmp.eq.s32.totalorder %s37, 0
      %p374 = por %p372, %p373
      %p375 = scmp.ne.s32.totalorder %s363, %s364
      %p376 = scmp.eq.s32.totalorder %s38, 18
      %p377 = por %p375, %p376
      %p379 = scmp.ne.s32.totalorder %s364, %s378
      %p380 = scmp.eq.s32.totalorder %s38, 0
      %p381 = por %p379, %p380
      %s383 = sadd.s32 %s382, 1
      %p386 = scmp.eq.s32.totalorder %s32, 18
      %p387 = scmp.ne.s32.totalorder %s382, %s384
      %p388 = scmp.eq.s32.totalorder %s32, 0
      %p389 = por %p387, %p388
      %p390 = scmp.ne.s32.totalorder %s382, %s384
      %p391 = scmp.eq.s32.totalorder %s37, 18
      %p392 = por %p390, %p391
      %p393 = scmp.ne.s32.totalorder %s384, %s385
      %p394 = scmp.eq.s32.totalorder %s37, 0
      %p395 = por %p393, %p394
      %p396 = scmp.ne.s32.totalorder %s384, %s385
      %p397 = scmp.eq.s32.totalorder %s38, 18
      %p398 = por %p396, %p397
      %p400 = scmp.ne.s32.totalorder %s385, %s399
      %p401 = scmp.eq.s32.totalorder %s38, 0
      %p402 = por %p400, %p401
      %s404 = sadd.s32 %s403, 1
      %p407 = scmp.eq.s32.totalorder %s32, 18
      %p408 = scmp.ne.s32.totalorder %s403, %s405
      %p409 = scmp.eq.s32.totalorder %s32, 0
      %p410 = por %p408, %p409
      %p411 = scmp.ne.s32.totalorder %s403, %s405
      %p412 = scmp.eq.s32.totalorder %s37, 18
      %p413 = por %p411, %p412
      %p414 = scmp.ne.s32.totalorder %s405, %s406
      %p415 = scmp.eq.s32.totalorder %s37, 0
      %p416 = por %p414, %p415
      %p417 = scmp.ne.s32.totalorder %s405, %s406
      %p418 = scmp.eq.s32.totalorder %s38, 18
      %p419 = por %p417, %p418
      %p421 = scmp.ne.s32.totalorder %s406, %s420
      %p422 = scmp.eq.s32.totalorder %s38, 0
      %p423 = por %p421, %p422
      %p424 = scmp.le.s32.totalorder 1, %s32
      %p425 = scmp.lt.s32.totalorder %s32, 20
      %p426 = pnand %p424, %p425
      %p427 = pneg %p426
      // Predicated region
      $region9: #{tpu_custom_call.1} parent=5 // pred_check
        _
      $region10: #{tpu_custom_call.1} parent=5 // pred_check_branch
        %429 = sbr.rel (%p426) target = $region12
      $region11: #{tpu_custom_call.1} parent=5 // pred_region
        %s430 = ssub.s32 %s32, 1
        // Predicated region
        $region13: #{tpu_custom_call.1} parent=11 // pred_check
          %p431 = pneg %p53
        $region14: #{tpu_custom_call.1} parent=11 // pred_check_branch
          %433 = sbr.rel (%p431) target = $region16
        $region15: #{tpu_custom_call.1} parent=11 // pred_region
          _
        $region16: #{tpu_custom_call.1} parent=11 // pred_fallthru
          _
        // Predicated region
        $region17: #{tpu_custom_call.1} parent=11 // pred_check
          %p434 = pneg %p134
        $region18: #{tpu_custom_call.1} parent=11 // pred_check_branch
          %436 = sbr.rel (%p434) target = $region20
        $region19: #{tpu_custom_call.1} parent=11 // pred_region
          _
        $region20: #{tpu_custom_call.1} parent=11 // pred_fallthru
          _
        // Predicated region
        $region21: #{tpu_custom_call.1} parent=11 // pred_check
          %p437 = pneg %p155
        $region22: #{tpu_custom_call.1} parent=11 // pred_check_branch
          %439 = sbr.rel (%p437) target = $region24
        $region23: #{tpu_custom_call.1} parent=11 // pred_region
          _
        $region24: #{tpu_custom_call.1} parent=11 // pred_fallthru
          _
        // Predicated region
        $region25: #{tpu_custom_call.1} parent=11 // pred_check
          %p440 = pneg %p176
        $region26: #{tpu_custom_call.1} parent=11 // pred_check_branch
          %442 = sbr.rel (%p440) target = $region28
        $region27: #{tpu_custom_call.1} parent=11 // pred_region
          _
        $region28: #{tpu_custom_call.1} parent=11 // pred_fallthru
          _
        // Predicated region
        $region29: #{tpu_custom_call.1} parent=11 // pred_check
          %p443 = pneg %p233
        $region30: #{tpu_custom_call.1} parent=11 // pred_check_branch
          %445 = sbr.rel (%p443) target = $region32
        $region31: #{tpu_custom_call.1} parent=11 // pred_region
          _
        $region32: #{tpu_custom_call.1} parent=11 // pred_fallthru
          _
        // Predicated region
        $region33: #{tpu_custom_call.1} parent=11 // pred_check
          %p446 = pneg %p290
        $region34: #{tpu_custom_call.1} parent=11 // pred_check_branch
          %448 = sbr.rel (%p446) target = $region36
        $region35: #{tpu_custom_call.1} parent=11 // pred_region
          _
        $region36: #{tpu_custom_call.1} parent=11 // pred_fallthru
          _
        // Predicated region
        $region37: #{tpu_custom_call.1} parent=11 // pred_check
          %p449 = pneg %p311
        $region38: #{tpu_custom_call.1} parent=11 // pred_check_branch
          %451 = sbr.rel (%p449) target = $region40
        $region39: #{tpu_custom_call.1} parent=11 // pred_region
          _
        $region40: #{tpu_custom_call.1} parent=11 // pred_fallthru
          _
        // Predicated region
        $region41: #{tpu_custom_call.1} parent=11 // pred_check
          %p452 = pneg %p332
        $region42: #{tpu_custom_call.1} parent=11 // pred_check_branch
          %454 = sbr.rel (%p452) target = $region44
        $region43: #{tpu_custom_call.1} parent=11 // pred_region
          %s456 = ssub.s32 256, 256
          %457 = vsyncadd [#allocation13], %s456
          %s458 = sshll.u32 [#allocation14], 4
          %s459 = int_to_ptr.vmem [resolvable:$true] %s458
          %464 = dma.hbm_to_vmem [thread:$0]  %s11, 256, %s459, [#allocation13], 64, 64, 4
        $region44: #{tpu_custom_call.1} parent=11 // pred_fallthru
          _
        // Predicated region
        $region45: #{tpu_custom_call.1} parent=11 // pred_check
          %p465 = pneg %p353
        $region46: #{tpu_custom_call.1} parent=11 // pred_check_branch
          %467 = sbr.rel (%p465) target = $region48
        $region47: #{tpu_custom_call.1} parent=11 // pred_region
          %s469 = ssub.s32 16, 16
          %470 = vsyncadd [#allocation16], %s469
          %s472 = sshll.u32 [#allocation15], 4
          %s473 = int_to_ptr.vmem [resolvable:$true] %s472
          %475 = dma.hbm_to_vmem [thread:$0]  %s12, 16, %s473, [#allocation16]
        $region48: #{tpu_custom_call.1} parent=11 // pred_fallthru
          _
        // Predicated region
        $region49: #{tpu_custom_call.1} parent=11 // pred_check
          %p476 = pneg %p374
        $region50: #{tpu_custom_call.1} parent=11 // pred_check_branch
          %478 = sbr.rel (%p476) target = $region52
        $region51: #{tpu_custom_call.1} parent=11 // pred_region
          _
        $region52: #{tpu_custom_call.1} parent=11 // pred_fallthru
          _
        // Predicated region
        $region53: #{tpu_custom_call.1} parent=11 // pred_check
          %p479 = pneg %p395
        $region54: #{tpu_custom_call.1} parent=11 // pred_check_branch
          %481 = sbr.rel (%p479) target = $region56
        $region55: #{tpu_custom_call.1} parent=11 // pred_region
          _
        $region56: #{tpu_custom_call.1} parent=11 // pred_fallthru
          _
      $region12: #{tpu_custom_call.1} parent=5 // pred_fallthru
        _
      %p482 = scmp.lt.s32.totalorder %s32, 19
      // Predicated region
      $region57: #{tpu_custom_call.1} parent=5 // pred_check
        %p483 = pneg %p482
      $region58: #{tpu_custom_call.1} parent=5 // pred_check_branch
        %485 = sbr.rel (%p483) target = $region60
      $region59: #{tpu_custom_call.1} parent=5 // pred_region
        // Predicated region
        $region61: #{tpu_custom_call.1} parent=59 // pred_check
          %p486 = pneg %p77
        $region62: #{tpu_custom_call.1} parent=59 // pred_check_branch
          %488 = sbr.rel (%p486) target = $region64
        $region63: #{tpu_custom_call.1} parent=59 // pred_region
          %s489 = sand.u32 %s67, 1
          %s490 = scalar_lea.sflag [#allocation7], %s489
          %s491 = sand.u32 %s67, 1
          %s492 = smul.addr %s491, 16
          %s493 = scalar_lea.vmem [#allocation6], %s492
          %p494 = scmp.lt.s32.totalorder %s32, 7
          %s495 = scalar_select %p494, %s32, 7
          %s497 = ssub.s32 256, 256
          %498 = vsyncadd %s490, %s497
          %s499 = smul.addr %s495, 4
          %s500 = smul.addr %s499, 64
          %s501 = scalar_lea.hbm %s1, %s500
          %s502 = sshll.u32 %s493, 4
          %s503 = int_to_ptr.vmem [resolvable:$true] %s502
          %508 = dma.hbm_to_vmem [thread:$0]  %s501, 256, %s503, %s490, 64, 64, 4
        $region64: #{tpu_custom_call.1} parent=59 // pred_fallthru
          _
        // Predicated region
        $region65: #{tpu_custom_call.1} parent=59 // pred_check
          %p509 = pneg %p107
        $region66: #{tpu_custom_call.1} parent=59 // pred_check_branch
          %511 = sbr.rel (%p509) target = $region68
        $region67: #{tpu_custom_call.1} parent=59 // pred_region
          %s512 = sand.u32 %s32, 1
          %s513 = scalar_lea.sflag [#allocation10], %s512
          %s514 = sand.u32 %s97, 1
          %s515 = scalar_lea.vmem [#allocation9], %s514
          %p516 = scmp.lt.s32.totalorder %s32, 7
          %s517 = scalar_select %p516, %s32, 7
          %s519 = ssub.s32 16, 16
          %520 = vsyncadd %s513, %s519
          %s521 = smul.addr %s517, 16
          %s522 = scalar_lea.hbm %s2, %s521
          %s524 = sshll.u32 %s515, 4
          %s525 = int_to_ptr.vmem [resolvable:$true] %s524
          %527 = dma.hbm_to_vmem [thread:$0]  %s522, 16, %s525, %s513
        $region68: #{tpu_custom_call.1} parent=59 // pred_fallthru
          _
        // Predicated region
        $region69: #{tpu_custom_call.1} parent=59 // pred_check
          %p528 = pneg %p206
        $region70: #{tpu_custom_call.1} parent=59 // pred_check_branch
          %530 = sbr.rel (%p528) target = $region72
        $region71: #{tpu_custom_call.1} parent=59 // pred_region
          %s531 = sand.u32 %s32, 1
          %s532 = scalar_lea.sflag [#allocation10], %s531
          %s533 = sand.u32 %s196, 1
          %s534 = smul.addr %s533, 16
          %s535 = scalar_lea.vmem [#allocation11], %s534
          %s536 = ssub.s32 %s32, 17
          %p537 = scmp.lt.s32.totalorder %s536, 1
          %s538 = scalar_select %p537, %s536, 1
          %p539 = scmp.gt.s32.totalorder %s538, 0
          %s540 = scalar_select %p539, %s538, 0
          %s542 = ssub.s32 256, 256
          %543 = vsyncadd %s532, %s542
          %s544 = smul.addr %s540, 4
          %s545 = smul.addr %s544, 64
          %s546 = scalar_lea.hbm %s6, %s545
          %s547 = sshll.u32 %s535, 4
          %s548 = int_to_ptr.vmem [resolvable:$true] %s547
          %553 = dma.hbm_to_vmem [thread:$0]  %s546, 256, %s548, %s532, 64, 64, 4
        $region72: #{tpu_custom_call.1} parent=59 // pred_fallthru
          _
        // Predicated region
        $region73: #{tpu_custom_call.1} parent=59 // pred_check
          %p554 = pneg %p263
        $region74: #{tpu_custom_call.1} parent=59 // pred_check_branch
          %556 = sbr.rel (%p554) target = $region76
        $region75: #{tpu_custom_call.1} parent=59 // pred_region
          %s557 = sand.u32 %s32, 1
          %s558 = scalar_lea.sflag [#allocation13], %s557
          %s559 = sand.u32 %s253, 1
          %s560 = smul.addr %s559, 16
          %s561 = scalar_lea.vmem [#allocation12], %s560
          %s562 = ssub.s32 %s32, 9
          %p563 = scmp.lt.s32.totalorder %s562, 8
          %s564 = scalar_select %p563, %s562, 8
          %p565 = scmp.gt.s32.totalorder %s564, 0
          %s566 = scalar_select %p565, %s564, 0
          %s568 = ssub.s32 256, 256
          %569 = vsyncadd %s558, %s568
          %s570 = smul.addr %s566, 4
          %s571 = smul.addr %s570, 64
          %s572 = scalar_lea.hbm %s8, %s571
          %s573 = sshll.u32 %s561, 4
          %s574 = int_to_ptr.vmem [resolvable:$true] %s573
          %579 = dma.hbm_to_vmem [thread:$0]  %s572, 256, %s574, %s558, 64, 64, 4
        $region76: #{tpu_custom_call.1} parent=59 // pred_fallthru
          _
      $region60: #{tpu_custom_call.1} parent=5 // pred_fallthru
        _
      %p580 = scmp.le.s32.totalorder 1, %s32
      %p581 = scmp.lt.s32.totalorder %s32, 20
      %p582 = pnand %p580, %p581
      %p583 = pneg %p582
      // Predicated region
      $region77: #{tpu_custom_call.1} parent=5 // pred_check
        _
      $region78: #{tpu_custom_call.1} parent=5 // pred_check_branch
        %585 = sbr.rel (%p582) target = $region80
      $region79: #{tpu_custom_call.1} parent=5 // pred_region
        %s586 = ssub.s32 %s32, 1
        %s587 = sand.u32 %s70, 1
        %s588 = scalar_lea.sflag [#allocation7], %s587
        %s589 = sand.u32 %s70, 1
        %s590 = smul.addr %s589, 16
        %s591 = scalar_lea.vmem [#allocation6], %s590
        // Predicated region
        $region81: #{tpu_custom_call.1} parent=79 // pred_check
          %p592 = pneg %p83
        $region82: #{tpu_custom_call.1} parent=79 // pred_check_branch
          %594 = sbr.rel (%p592) target = $region84
        $region83: #{tpu_custom_call.1} parent=79 // pred_region
          %595 = dma.done %s588, 256
        $region84: #{tpu_custom_call.1} parent=79 // pred_fallthru
          _
        %s596 = sand.u32 %s37, 1
        %s597 = scalar_lea.sflag [#allocation10], %s596
        %s598 = sand.u32 %s100, 1
        %s599 = scalar_lea.vmem [#allocation9], %s598
        // Predicated region
        $region85: #{tpu_custom_call.1} parent=79 // pred_check
          %p600 = pneg %p113
        $region86: #{tpu_custom_call.1} parent=79 // pred_check_branch
          %602 = sbr.rel (%p600) target = $region88
        $region87: #{tpu_custom_call.1} parent=79 // pred_region
          %603 = dma.done %s597, 16
        $region88: #{tpu_custom_call.1} parent=79 // pred_fallthru
          _
        %s604 = sand.u32 %s37, 1
        %s605 = scalar_lea.sflag [#allocation10], %s604
        %s606 = sand.u32 %s199, 1
        %s607 = smul.addr %s606, 16
        %s608 = scalar_lea.vmem [#allocation11], %s607
        // Predicated region
        $region89: #{tpu_custom_call.1} parent=79 // pred_check
          %p609 = pneg %p212
        $region90: #{tpu_custom_call.1} parent=79 // pred_check_branch
          %611 = sbr.rel (%p609) target = $region92
        $region91: #{tpu_custom_call.1} parent=79 // pred_region
          %612 = dma.done %s605, 256
        $region92: #{tpu_custom_call.1} parent=79 // pred_fallthru
          _
        %s613 = sand.u32 %s37, 1
        %s614 = scalar_lea.sflag [#allocation13], %s613
        %s615 = sand.u32 %s256, 1
        %s616 = smul.addr %s615, 16
        %s617 = scalar_lea.vmem [#allocation12], %s616
        // Predicated region
        $region93: #{tpu_custom_call.1} parent=79 // pred_check
          %p618 = pneg %p269
        $region94: #{tpu_custom_call.1} parent=79 // pred_check_branch
          %620 = sbr.rel (%p618) target = $region96
        $region95: #{tpu_custom_call.1} parent=79 // pred_region
          %621 = dma.done %s614, 256
        $region96: #{tpu_custom_call.1} parent=79 // pred_fallthru
          _
        // Predicated region
        $region97: #{tpu_custom_call.1} parent=79 // pred_check
          %p622 = pneg %p332
        $region98: #{tpu_custom_call.1} parent=79 // pred_check_branch
          %624 = sbr.rel (%p622) target = $region100
        $region99: #{tpu_custom_call.1} parent=79 // pred_region
          %625 = dma.done [#allocation13], 256
        $region100: #{tpu_custom_call.1} parent=79 // pred_fallthru
          _
        // Predicated region
        $region101: #{tpu_custom_call.1} parent=79 // pred_check
          %p626 = pneg %p353
        $region102: #{tpu_custom_call.1} parent=79 // pred_check_branch
          %628 = sbr.rel (%p626) target = $region104
        $region103: #{tpu_custom_call.1} parent=79 // pred_region
          %629 = dma.done [#allocation16], 16
        $region104: #{tpu_custom_call.1} parent=79 // pred_fallthru
          _
        %p630 = pneg %p53
        %p631 = pneg %p50
        %s632 = sand.u32 %s70, 1
        %s633 = scalar_lea.sflag [#allocation7], %s632
        %s634 = sand.u32 %s70, 1
        %s635 = smul.addr %s634, 16
        %s636 = scalar_lea.vmem [#allocation6], %s635
        %p637 = pneg %p83
        %p638 = pneg %p80
        %s639 = sand.u32 %s37, 1
        %s640 = scalar_lea.sflag [#allocation10], %s639
        %s641 = sand.u32 %s100, 1
        %s642 = scalar_lea.vmem [#allocation9], %s641
        %p643 = pneg %p113
        %p644 = pneg %p110
        %p645 = pneg %p134
        %p646 = pneg %p131
        %p647 = pneg %p155
        %p648 = pneg %p152
        %p649 = pneg %p176
        %p650 = pneg %p173
        %s651 = sand.u32 %s37, 1
        %s652 = scalar_lea.sflag [#allocation10], %s651
        %s653 = sand.u32 %s199, 1
        %s654 = smul.addr %s653, 16
        %s655 = scalar_lea.vmem [#allocation11], %s654
        %p656 = pneg %p212
        %p657 = pneg %p209
        %p658 = pneg %p233
        %p659 = pneg %p230
        %s660 = sand.u32 %s37, 1
        %s661 = scalar_lea.sflag [#allocation13], %s660
        %s662 = sand.u32 %s256, 1
        %s663 = smul.addr %s662, 16
        %s664 = scalar_lea.vmem [#allocation12], %s663
        %p665 = pneg %p269
        %p666 = pneg %p266
        %p667 = pneg %p290
        %p668 = pneg %p287
        %p669 = pneg %p311
        %p670 = pneg %p308
        %p671 = pneg %p332
        %p672 = pneg %p329
        %p673 = pneg %p353
        %p674 = pneg %p350
        %p675 = pneg %p374
        %p676 = pneg %p371
        %p677 = pneg %p395
        %p678 = pneg %p392
        %p679 = pneg %p416
        %p680 = pneg %p413
        %p681 = scmp.lt.s32.totalorder %s37, 7
        %s682 = scalar_select %p681, %s37, 7
        %p683 = scmp.lt.s32.totalorder %s37, 7
        %s684 = scalar_select %p683, %s37, 7
        %s685 = ssub.s32 %s37, 17
        %p686 = scmp.lt.s32.totalorder %s685, 1
        %s687 = scalar_select %p686, %s685, 1
        %p688 = scmp.gt.s32.totalorder %s687, 0
        %s689 = scalar_select %p688, %s687, 0
        %s690 = ssub.s32 %s37, 9
        %p691 = scmp.lt.s32.totalorder %s690, 8
        %s692 = scalar_select %p691, %s690, 8
        %p693 = scmp.gt.s32.totalorder %s692, 0
        %s694 = scalar_select %p693, %s692, 0
        %p696 = scmp.eq.s32.totalorder %s37, 0
        // Predicated region
        $region105: #{tpu_custom_call.1} parent=79 // pred_check
          %p697 = pneg %p696
        $region106: #{tpu_custom_call.1} parent=79 // pred_check_branch
          %699 = sbr.rel (%p697) target = $region108
        $region107: #{tpu_custom_call.1} parent=79 // pred_region
          %v700 = vld [vmem:[%s0] sm:$0x3]
          %v701 = vmul.f32 %v700, %v700
          %vm702 = vcmask 254976
          %v703 = vsel %vm702, %v701, 0.0
          %704 = vadd.xlane.f32.xlu0 %v703
          %v705 = vpop.xlane.xlu0 %704
          %v706 = vrcp.pop 32.0
          %v707 = vmul.f32 %v705, %v706
          %v708 = vadd.f32 %v707, 1e-08
          %v709 = vrsqrt.pop %v708
          %v710 = vmul.f32 %v700, %v709
          %711 = vst.msk [vmem:[#allocation2] sm:$0x3] %vm702, %v710
        $region108: #{tpu_custom_call.1} parent=79 // pred_fallthru
          _
        %p712 = scmp.lt.s32.totalorder %s37, 8
        // Predicated region
        $region109: #{tpu_custom_call.1} parent=79 // pred_check
          %p713 = pneg %p712
        $region110: #{tpu_custom_call.1} parent=79 // pred_check_branch
          %715 = sbr.rel (%p713) target = $region112
        $region111: #{tpu_custom_call.1} parent=79 // pred_region
          %v716 = vld [vmem:[#allocation2] sm:$0x3]
          %v717 = vmul.f32 %v716, 0.0025
          %v718 = vpack.c.bf16 %v717, %v717
          %v719 = vld [vmem:[%s591] sm:$0xf]
          %v720 = vld [vmem:[%s591 + $0x4] sm:$0xf]
          %v721 = vld [vmem:[%s591 + $0x8] sm:$0xf]
          %v722 = vld [vmem:[%s591 + $0xc] sm:$0xf]
          %v723 = vld [vmem:[%s599] sm:$0x1]
          %v724 = vmul.f32 %v723, 0.01
          %v726 = vlaneseq
          %v727 = vshrl.u32 %v726, 7
          %v728 = vsub.s32 0, %v727
          %v729 = vrot.slane %v724, %v728
          %v735 = vunpack.c.l.b16 %v719
          %v736 = vunpack.c.l.b16 %v720
          %v737 = vunpack.c.l.b16 %v721
          %v738 = vunpack.c.l.b16 %v722
          %v739 = vpack.c.b16 %v736, %v735
          %v740 = vpack.c.b16 %v738, %v737
          %vm743 = vcmask 261120
          %v745 = vsel %vm743, %v718, 0
          %747 = vmatprep.subr.bf16.mxu0 0
          %748 = vmatpush1.bf16.msra.mxu0 %v739
          %749 = vmatprep.subr.bf16.mxu0 0
          %750 = vmatpush1.bf16.msra.mxu0 %v740
          %751 = vmatprep.subr.bf16.mxu0 0
          %752 = vmatpush1.bf16.msra.mxu0 0
          %753 = vmatprep.subr.bf16.mxu0 0
          %754 = vmatpush1.bf16.msra.mxu0 0
          %755 = vmatprep.subr.bf16.mxu0 0
          %756 = vmatpush1.bf16.msra.mxu0 0
          %757 = vmatprep.subr.bf16.mxu0 0
          %758 = vmatpush1.bf16.msra.mxu0 0
          %759 = vmatprep.subr.bf16.mxu0 0
          %760 = vmatpush1.bf16.msra.mxu0 0
          %761 = vmatprep.subr.bf16.mxu0 0
          %762 = vmatpush1.bf16.msra.mxu0 0
          %763 = vmatprep.subr.bf16.mxu0 0
          %764 = vmatpush1.bf16.msra.mxu0 0
          %765 = vmatprep.subr.bf16.mxu0 0
          %766 = vmatpush1.bf16.msra.mxu0 0
          %767 = vmatprep.subr.bf16.mxu0 0
          %768 = vmatpush1.bf16.msra.mxu0 0
          %769 = vmatprep.subr.bf16.mxu0 0
          %770 = vmatpush1.bf16.msra.mxu0 0
          %771 = vmatprep.subr.bf16.mxu0 0
          %772 = vmatpush1.bf16.msra.mxu0 0
          %773 = vmatprep.subr.bf16.mxu0 0
          %774 = vmatpush1.bf16.msra.mxu0 0
          %775 = vmatprep.subr.bf16.mxu0 0
          %776 = vmatpush1.bf16.msra.mxu0 0
          %777 = vmatprep.subr.bf16.mxu0 0
          %778 = vmatpush1.bf16.msra.mxu0 0
          %779 = vmatprep.mubr.bf16.mxu0 0
          %780 = vmatmul.mubr.bf16.gmra.mrb[0].mxu0 %v745
          %v781 = vpop.f32.mrb[0].mxu0
          %v782 = vadd.f32 %v729, %v781
          %v783 = vpop.f32.mrb[0].mxu0
          %v784 = vpop.f32.mrb[0].mxu0
          %v785 = vpop.f32.mrb[0].mxu0
          %786 = vdwg.mxu0
          %vm787 = vcmp.ge.f32.partialorder %v782, 0.0
          %v788 = vmul.f32 %v782, 0.2
          %v789 = vsel %vm787, %v782, %v788
          %vm790 = vcmask 254976
          %791 = vst.msk [vmem:[#allocation2] sm:$0x3] %vm790, %v789
        $region112: #{tpu_custom_call.1} parent=79 // pred_fallthru
          _
        %p792 = scmp.eq.s32.totalorder %s37, 8
        // Predicated region
        $region113: #{tpu_custom_call.1} parent=79 // pred_check
          %p793 = pneg %p792
        $region114: #{tpu_custom_call.1} parent=79 // pred_check_branch
          %795 = sbr.rel (%p793) target = $region116
        $region115: #{tpu_custom_call.1} parent=79 // pred_region
          %v796 = vld [vmem:[%s3] sm:$0xff]
          %v797 = vld [vmem:[%s3 + $0x8] sm:$0xff]
          %v798 = vld [vmem:[%s5] sm:$0x1]
          %v799 = vld [vmem:[%s4] sm:$0xff]
          %v800 = vld [vmem:[%s4 + $0x8] sm:$0xff]
          %v801 = vld [vmem:[%s4 + $0x10] sm:$0xff]
          %v802 = vld [vmem:[%s4 + $0x18] sm:$0xff]
          %v804 = vlaneseq
          %v805 = vshrl.u32 %v804, 7
          %v806 = vsub.s32 0, %v805
          %v807 = vrot.slane %v798, %v806
          %810 = vset.pattern.permute.xlu0 0
          %811 = vperm.xlu0 %810, %v799
          %v812 = vpop.permute.xlu0 %811
          %815 = vset.pattern.permute.xlu0 0
          %816 = vperm.xlu0 %815, %v800
          %v817 = vpop.permute.xlu0 %816
          %820 = vset.pattern.permute.xlu0 0
          %821 = vperm.xlu0 %820, %v801
          %v822 = vpop.permute.xlu0 %821
          %825 = vset.pattern.permute.xlu0 0
          %826 = vperm.xlu0 %825, %v802
          %v827 = vpop.permute.xlu0 %826
          %v829 = vmul.f32 %v807, %v812
          %v830 = vmul.f32 %v807, %v817
          %v831 = vmul.f32 %v807, %v822
          %v832 = vmul.f32 %v807, %v827
          %v833 = vadd.f32 %v796, %v829
          %v834 = vadd.f32 %v797, %v830
          %v835 = vadd.f32 %v796, %v831
          %v836 = vadd.f32 %v797, %v832
          %vm837 = vcmp.ge.f32.partialorder %v833, 0.0
          %vm838 = vcmp.ge.f32.partialorder %v834, 0.0
          %vm839 = vcmp.ge.f32.partialorder %v835, 0.0
          %vm840 = vcmp.ge.f32.partialorder %v836, 0.0
          %v841 = vmul.f32 %v833, 0.2
          %v842 = vmul.f32 %v834, 0.2
          %v843 = vmul.f32 %v835, 0.2
          %v844 = vmul.f32 %v836, 0.2
          %v845 = vsel %vm837, %v833, %v841
          %v846 = vsel %vm838, %v834, %v842
          %v847 = vsel %vm839, %v835, %v843
          %v848 = vsel %vm840, %v836, %v844
          %vm849 = vcmask 261120
          %v850 = vsel %vm849, %v845, 0.0
          %v851 = vsel %vm849, %v846, 0.0
          %v852 = vadd.f32 %v850, %v851
          %v853 = vrot.slane %v852, 4
          %v854 = vadd.f32 %v852, %v853
          %v855 = vrot.slane %v854, 2
          %v856 = vadd.f32 %v854, %v855
          %v857 = vrot.slane %v856, 1
          %v858 = vadd.f32 %v856, %v857
          %v859 = vsel %vm849, %v847, 0.0
          %v860 = vsel %vm849, %v848, 0.0
          %v861 = vadd.f32 %v859, %v860
          %v862 = vrot.slane %v861, 4
          %v863 = vadd.f32 %v861, %v862
          %v864 = vrot.slane %v863, 2
          %v865 = vadd.f32 %v863, %v864
          %v866 = vrot.slane %v865, 1
          %v867 = vadd.f32 %v865, %v866
          %v868 = vrcp.pop 16.0
          %v869 = vmul.f32 %v858, %v868
          %v870 = vmul.f32 %v867, %v868
          %v871 = vsub.f32 %v845, %v869
          %v872 = vsub.f32 %v846, %v869
          %v873 = vsub.f32 %v847, %v870
          %v874 = vsub.f32 %v848, %v870
          %v875 = vmul.f32 %v871, %v871
          %v876 = vmul.f32 %v872, %v872
          %v877 = vmul.f32 %v873, %v873
          %v878 = vmul.f32 %v874, %v874
          %v879 = vsel %vm849, %v875, 0.0
          %v880 = vsel %vm849, %v876, 0.0
          %v881 = vadd.f32 %v879, %v880
          %v882 = vrot.slane %v881, 4
          %v883 = vadd.f32 %v881, %v882
          %v884 = vrot.slane %v883, 2
          %v885 = vadd.f32 %v883, %v884
          %v886 = vrot.slane %v885, 1
          %v887 = vadd.f32 %v885, %v886
          %v888 = vsel %vm849, %v877, 0.0
          %v889 = vsel %vm849, %v878, 0.0
          %v890 = vadd.f32 %v888, %v889
          %v891 = vrot.slane %v890, 4
          %v892 = vadd.f32 %v890, %v891
          %v893 = vrot.slane %v892, 2
          %v894 = vadd.f32 %v892, %v893
          %v895 = vrot.slane %v894, 1
          %v896 = vadd.f32 %v894, %v895
          %v897 = vmul.f32 %v887, %v868
          %v898 = vmul.f32 %v896, %v868
          %v899 = vadd.f32 %v897, 1e-05
          %v900 = vadd.f32 %v898, 1e-05
          %v901 = vrsqrt.pop %v899
          %v902 = vrsqrt.pop %v900
          %v903 = vmul.f32 %v871, %v901
          %v904 = vmul.f32 %v872, %v901
          %v905 = vmul.f32 %v873, %v902
          %v906 = vmul.f32 %v874, %v902
          %v907 = vld [vmem:[#allocation2] sm:$0x3]
          %v908 = vmul.f32 %v907, 0.25
          %v909 = vpack.c.bf16 %v908, %v908
          %v910 = vld [vmem:[%s608] sm:$0xf]
          %v911 = vld [vmem:[%s608 + $0x4] sm:$0xf]
          %v912 = vld [vmem:[%s608 + $0x8] sm:$0xf]
          %v913 = vld [vmem:[%s608 + $0xc] sm:$0xf]
          %v914 = vld [vmem:[%s7] sm:$0x1]
          %v916 = vlaneseq
          %v917 = vshrl.u32 %v916, 7
          %v918 = vsub.s32 0, %v917
          %v919 = vrot.slane %v914, %v918
          %v925 = vunpack.c.l.b16 %v910
          %v926 = vunpack.c.l.b16 %v911
          %v927 = vunpack.c.l.b16 %v912
          %v928 = vunpack.c.l.b16 %v913
          %v929 = vpack.c.b16 %v926, %v925
          %v930 = vpack.c.b16 %v928, %v927
          %v934 = vsel %vm849, %v909, 0
          %936 = vmatprep.subr.bf16.mxu0 0
          %937 = vmatpush1.bf16.msra.mxu0 %v929
          %938 = vmatprep.subr.bf16.mxu0 0
          %939 = vmatpush1.bf16.msra.mxu0 %v930
          %940 = vmatprep.subr.bf16.mxu0 0
          %941 = vmatpush1.bf16.msra.mxu0 0
          %942 = vmatprep.subr.bf16.mxu0 0
          %943 = vmatpush1.bf16.msra.mxu0 0
          %944 = vmatprep.subr.bf16.mxu0 0
          %945 = vmatpush1.bf16.msra.mxu0 0
          %946 = vmatprep.subr.bf16.mxu0 0
          %947 = vmatpush1.bf16.msra.mxu0 0
          %948 = vmatprep.subr.bf16.mxu0 0
          %949 = vmatpush1.bf16.msra.mxu0 0
          %950 = vmatprep.subr.bf16.mxu0 0
          %951 = vmatpush1.bf16.msra.mxu0 0
          %952 = vmatprep.subr.bf16.mxu0 0
          %953 = vmatpush1.bf16.msra.mxu0 0
          %954 = vmatprep.subr.bf16.mxu0 0
          %955 = vmatpush1.bf16.msra.mxu0 0
          %956 = vmatprep.subr.bf16.mxu0 0
          %957 = vmatpush1.bf16.msra.mxu0 0
          %958 = vmatprep.subr.bf16.mxu0 0
          %959 = vmatpush1.bf16.msra.mxu0 0
          %960 = vmatprep.subr.bf16.mxu0 0
          %961 = vmatpush1.bf16.msra.mxu0 0
          %962 = vmatprep.subr.bf16.mxu0 0
          %963 = vmatpush1.bf16.msra.mxu0 0
          %964 = vmatprep.subr.bf16.mxu0 0
          %965 = vmatpush1.bf16.msra.mxu0 0
          %966 = vmatprep.subr.bf16.mxu0 0
          %967 = vmatpush1.bf16.msra.mxu0 0
          %968 = vmatprep.mubr.bf16.mxu0 0
          %969 = vmatmul.mubr.bf16.gmra.mrb[0].mxu0 %v934
          %v970 = vpop.f32.mrb[0].mxu0
          %v971 = vadd.f32 %v919, %v970
          %v972 = vpop.f32.mrb[0].mxu0
          %v973 = vpop.f32.mrb[0].mxu0
          %v974 = vpop.f32.mrb[0].mxu0
          %975 = vdwg.mxu0
          %v978 = vunpack.c.l.s4 1966171168
          %v979 = vunpack.c.0.s8 %v978
          %v980 = vlaneseq
          %v981 = vshrl.u32 %v980, 7
          %v982 = vsub.s32 %v979, %v981
          %v983 = vrot.slane %v971, %v982
          %v984 = vcombine.high %v983, %v983
          %v986 = vunpack.c.l.s4 1966171168
          %v987 = vunpack.c.0.s8 %v986
          %v988 = vlaneseq
          %v989 = vshrl.u32 %v988, 7
          %v990 = vsub.s32 %v987, %v989
          %v991 = vrot.slane %v983, %v990
          %v993 = vunpack.c.l.s4 1966171168
          %v994 = vunpack.c.0.s8 %v993
          %v995 = vlaneseq
          %v996 = vshrl.u32 %v995, 7
          %v997 = vsub.s32 %v994, %v996
          %v998 = vrot.slane %v984, %v997
          %v999 = vlaneseq
          %v1000 = vshrl.u32 %v999, 7
          %v1001 = vsub.s32 0, %v1000
          %v1002 = vrot.slane %v991, %v1001
          %v1003 = vlaneseq
          %v1004 = vshrl.u32 %v1003, 7
          %v1005 = vsub.s32 0, %v1004
          %v1006 = vrot.slane %v998, %v1005
          %v1009 = vmul.f32 %v1002, %v903
          %v1010 = vmul.f32 %v1002, %v904
          %v1011 = vmul.f32 %v1006, %v905
          %v1012 = vmul.f32 %v1006, %v906
          %1013 = vrot.lane.b32.xlu0 %v1002, 96
          %v1014 = vpop.permute.xlu0 %1013
          %1015 = vrot.lane.b32.xlu0 %v1006, 96
          %v1016 = vpop.permute.xlu0 %1015
          %v1019 = vadd.f32 %v1009, %v1014
          %v1020 = vadd.f32 %v1010, %v1014
          %v1021 = vadd.f32 %v1011, %v1016
          %v1022 = vadd.f32 %v1012, %v1016
          %1023 = vst.msk [vmem:[#allocation3] sm:$0xff] %vm849, 0.0
          %1024 = vst.msk [vmem:[#allocation3 + $0x20] sm:$0xff] %vm849, 0.0
          %1025 = vst.msk [vmem:[#allocation3 + $0x18] sm:$0xff] %vm849, 0.0
          %1026 = vst.msk [vmem:[#allocation3 + $0x38] sm:$0xff] %vm849, 0.0
          %v1027 = vmul.f32 %v1019, 0.083333336
          %v1028 = vmul.f32 %v1020, 0.083333336
          %v1029 = vmul.f32 %v1021, 0.083333336
          %v1030 = vmul.f32 %v1022, 0.083333336
          %1031 = vst.msk [vmem:[#allocation3 + $0x8] sm:$0xff] %vm849, %v1027
          %1032 = vst.msk [vmem:[#allocation3 + $0x10] sm:$0xff] %vm849, %v1028
          %1033 = vst.msk [vmem:[#allocation3 + $0x28] sm:$0xff] %vm849, %v1029
          %1034 = vst.msk [vmem:[#allocation3 + $0x30] sm:$0xff] %vm849, %v1030
          %v1035 = vld [vmem:[#allocation3 + $0x3] sm:$0xff]
          %v1036 = vld [vmem:[#allocation3 + $0xb] sm:$0xff]
          %v1037 = vld [vmem:[#allocation3 + $0x23] sm:$0xff]
          %v1038 = vld [vmem:[#allocation3 + $0x2b] sm:$0xff]
          %v1039 = vld [vmem:[%s10] sm:$0xff]
          %v1040 = vld [vmem:[%s10 + $0x8] sm:$0xff]
          %1042 = vset.pattern.permute.xlu0 0
          %1043 = vperm.xlu0 %1042, %v1039
          %v1044 = vpop.permute.xlu0 %1043
          %1047 = vset.pattern.permute.xlu0 0
          %1048 = vperm.xlu0 %1047, %v1040
          %v1049 = vpop.permute.xlu0 %1048
          %v1051 = vmul.f32 %v1035, %v1044
          %v1052 = vmul.f32 %v1036, %v1049
          %v1053 = vmul.f32 %v1037, %v1044
          %v1054 = vmul.f32 %v1038, %v1049
          %v1055 = vpack.c.bf16 %v1052, %v1051
          %v1056 = vpack.c.bf16 %v1054, %v1053
          %1057 = vst.msk [vmem:[#allocation4] sm:$0xff] %vm849, %v1055
          %1058 = vst.msk [vmem:[#allocation4 + $0x8] sm:$0xff] %vm849, %v1056
          %v1059 = vld [vmem:[#allocation3 + $0x4] sm:$0xff]
          %v1060 = vld [vmem:[#allocation3 + $0xc] sm:$0xff]
          %v1061 = vld [vmem:[#allocation3 + $0x24] sm:$0xff]
          %v1062 = vld [vmem:[#allocation3 + $0x2c] sm:$0xff]
          %v1063 = vpack.c.bf16 %v1060, %v1059
          %v1064 = vpack.c.bf16 %v1062, %v1061
          %s1065 = scalar_lea.vmem [#allocation4], 16
          %1066 = vst.msk [vmem:[%s1065] sm:$0xff] %vm849, %v1063
          %1067 = vst.msk [vmem:[%s1065 + $0x8] sm:$0xff] %vm849, %v1064
          %v1068 = vld [vmem:[#allocation3 + $0x5] sm:$0xff]
          %v1069 = vld [vmem:[#allocation3 + $0xd] sm:$0xff]
          %v1070 = vld [vmem:[#allocation3 + $0x25] sm:$0xff]
          %v1071 = vld [vmem:[#allocation3 + $0x2d] sm:$0xff]
          %s1072 = scalar_lea.vmem %s10, 16
          %v1073 = vld [vmem:[%s1072] sm:$0xff]
          %v1074 = vld [vmem:[%s1072 + $0x8] sm:$0xff]
          %1076 = vset.pattern.permute.xlu0 0
          %1077 = vperm.xlu0 %1076, %v1073
          %v1078 = vpop.permute.xlu0 %1077
          %1081 = vset.pattern.permute.xlu0 0
          %1082 = vperm.xlu0 %1081, %v1074
          %v1083 = vpop.permute.xlu0 %1082
          %v1085 = vmul.f32 %v1068, %v1078
          %v1086 = vmul.f32 %v1069, %v1083
          %v1087 = vmul.f32 %v1070, %v1078
          %v1088 = vmul.f32 %v1071, %v1083
          %v1089 = vpack.c.bf16 %v1086, %v1085
          %v1090 = vpack.c.bf16 %v1088, %v1087
          %s1091 = scalar_lea.vmem [#allocation4], 32
          %1092 = vst.msk [vmem:[%s1091] sm:$0xff] %vm849, %v1089
          %1093 = vst.msk [vmem:[%s1091 + $0x8] sm:$0xff] %vm849, %v1090
          %v1094 = vld [vmem:[#allocation3 + $0x7] sm:$0xff]
          %v1095 = vld [vmem:[#allocation3 + $0xf] sm:$0xff]
          %v1096 = vld [vmem:[#allocation3 + $0x27] sm:$0xff]
          %v1097 = vld [vmem:[#allocation3 + $0x2f] sm:$0xff]
          %v1098 = vld [vmem:[%s10] sm:$0xff]
          %v1099 = vld [vmem:[%s10 + $0x8] sm:$0xff]
          %1101 = vset.pattern.permute.xlu0 0
          %1102 = vperm.xlu0 %1101, %v1098
          %v1103 = vpop.permute.xlu0 %1102
          %1106 = vset.pattern.permute.xlu0 0
          %1107 = vperm.xlu0 %1106, %v1099
          %v1108 = vpop.permute.xlu0 %1107
          %v1110 = vmul.f32 %v1094, %v1103
          %v1111 = vmul.f32 %v1095, %v1108
          %v1112 = vmul.f32 %v1096, %v1103
          %v1113 = vmul.f32 %v1097, %v1108
          %v1114 = vpack.c.bf16 %v1111, %v1110
          %v1115 = vpack.c.bf16 %v1113, %v1112
          %s1116 = scalar_lea.vmem [#allocation4], 48
          %1117 = vst.msk [vmem:[%s1116] sm:$0xff] %vm849, %v1114
          %1118 = vst.msk [vmem:[%s1116 + $0x8] sm:$0xff] %vm849, %v1115
          %v1119 = vld [vmem:[#allocation3 + $0x8] sm:$0xff]
          %v1120 = vld [vmem:[#allocation3 + $0x10] sm:$0xff]
          %v1121 = vld [vmem:[#allocation3 + $0x28] sm:$0xff]
          %v1122 = vld [vmem:[#allocation3 + $0x30] sm:$0xff]
          %v1123 = vpack.c.bf16 %v1120, %v1119
          %v1124 = vpack.c.bf16 %v1122, %v1121
          %s1125 = scalar_lea.vmem [#allocation4], 64
          %1126 = vst.msk [vmem:[%s1125] sm:$0xff] %vm849, %v1123
          %1127 = vst.msk [vmem:[%s1125 + $0x8] sm:$0xff] %vm849, %v1124
          %v1128 = vld [vmem:[#allocation3 + $0x9] sm:$0xff]
          %v1129 = vld [vmem:[#allocation3 + $0x11] sm:$0xff]
          %v1130 = vld [vmem:[#allocation3 + $0x29] sm:$0xff]
          %v1131 = vld [vmem:[#allocation3 + $0x31] sm:$0xff]
          %v1132 = vld [vmem:[%s1072] sm:$0xff]
          %v1133 = vld [vmem:[%s1072 + $0x8] sm:$0xff]
          %1135 = vset.pattern.permute.xlu0 0
          %1136 = vperm.xlu0 %1135, %v1132
          %v1137 = vpop.permute.xlu0 %1136
          %1140 = vset.pattern.permute.xlu0 0
          %1141 = vperm.xlu0 %1140, %v1133
          %v1142 = vpop.permute.xlu0 %1141
          %v1144 = vmul.f32 %v1128, %v1137
          %v1145 = vmul.f32 %v1129, %v1142
          %v1146 = vmul.f32 %v1130, %v1137
          %v1147 = vmul.f32 %v1131, %v1142
          %v1148 = vpack.c.bf16 %v1145, %v1144
          %v1149 = vpack.c.bf16 %v1147, %v1146
          %s1150 = scalar_lea.vmem [#allocation4], 80
          %1151 = vst.msk [vmem:[%s1150] sm:$0xff] %vm849, %v1148
          %1152 = vst.msk [vmem:[%s1150 + $0x8] sm:$0xff] %vm849, %v1149
          %v1153 = vld [vmem:[#allocation3 + $0xb] sm:$0xff]
          %v1154 = vld [vmem:[#allocation3 + $0x13] sm:$0xff]
          %v1155 = vld [vmem:[#allocation3 + $0x2b] sm:$0xff]
          %v1156 = vld [vmem:[#allocation3 + $0x33] sm:$0xff]
          %v1157 = vld [vmem:[%s10] sm:$0xff]
          %v1158 = vld [vmem:[%s10 + $0x8] sm:$0xff]
          %1160 = vset.pattern.permute.xlu0 0
          %1161 = vperm.xlu0 %1160, %v1157
          %v1162 = vpop.permute.xlu0 %1161
          %1165 = vset.pattern.permute.xlu0 0
          %1166 = vperm.xlu0 %1165, %v1158
          %v1167 = vpop.permute.xlu0 %1166
          %v1169 = vmul.f32 %v1153, %v1162
          %v1170 = vmul.f32 %v1154, %v1167
          %v1171 = vmul.f32 %v1155, %v1162
          %v1172 = vmul.f32 %v1156, %v1167
          %v1173 = vpack.c.bf16 %v1170, %v1169
          %v1174 = vpack.c.bf16 %v1172, %v1171
          %s1175 = scalar_lea.vmem [#allocation4], 96
          %1176 = vst.msk [vmem:[%s1175] sm:$0xff] %vm849, %v1173
          %1177 = vst.msk [vmem:[%s1175 + $0x8] sm:$0xff] %vm849, %v1174
          %v1178 = vld [vmem:[#allocation3 + $0xc] sm:$0xff]
          %v1179 = vld [vmem:[#allocation3 + $0x14] sm:$0xff]
          %v1180 = vld [vmem:[#allocation3 + $0x2c] sm:$0xff]
          %v1181 = vld [vmem:[#allocation3 + $0x34] sm:$0xff]
          %v1182 = vpack.c.bf16 %v1179, %v1178
          %v1183 = vpack.c.bf16 %v1181, %v1180
          %s1184 = scalar_lea.vmem [#allocation4], 112
          %1185 = vst.msk [vmem:[%s1184] sm:$0xff] %vm849, %v1182
          %1186 = vst.msk [vmem:[%s1184 + $0x8] sm:$0xff] %vm849, %v1183
          %v1187 = vld [vmem:[#allocation3 + $0xd] sm:$0xff]
          %v1188 = vld [vmem:[#allocation3 + $0x15] sm:$0xff]
          %v1189 = vld [vmem:[#allocation3 + $0x2d] sm:$0xff]
          %v1190 = vld [vmem:[#allocation3 + $0x35] sm:$0xff]
          %v1191 = vld [vmem:[%s1072] sm:$0xff]
          %v1192 = vld [vmem:[%s1072 + $0x8] sm:$0xff]
          %1194 = vset.pattern.permute.xlu0 0
          %1195 = vperm.xlu0 %1194, %v1191
          %v1196 = vpop.permute.xlu0 %1195
          %1199 = vset.pattern.permute.xlu0 0
          %1200 = vperm.xlu0 %1199, %v1192
          %v1201 = vpop.permute.xlu0 %1200
          %v1203 = vmul.f32 %v1187, %v1196
          %v1204 = vmul.f32 %v1188, %v1201
          %v1205 = vmul.f32 %v1189, %v1196
          %v1206 = vmul.f32 %v1190, %v1201
          %v1207 = vpack.c.bf16 %v1204, %v1203
          %v1208 = vpack.c.bf16 %v1206, %v1205
          %s1209 = scalar_lea.vmem [#allocation4], 128
          %1210 = vst.msk [vmem:[%s1209] sm:$0xff] %vm849, %v1207
          %1211 = vst.msk [vmem:[%s1209 + $0x8] sm:$0xff] %vm849, %v1208
          %1212 = vst.msk [vmem:[#allocation5] sm:$0xff] %vm849, 0.0
          %1213 = vst.msk [vmem:[#allocation5 + $0x8] sm:$0xff] %vm849, 0.0
          %1214 = vst.msk [vmem:[#allocation5 + $0x10] sm:$0xff] %vm849, 0.0
          %1215 = vst.msk [vmem:[#allocation5 + $0x18] sm:$0xff] %vm849, 0.0
        $region116: #{tpu_custom_call.1} parent=79 // pred_fallthru
          _
        %p1216 = scmp.ge.s32.totalorder %s37, 9
        %p1217 = scmp.le.s32.totalorder %s37, 17
        %p1218 = pnand %p1216, %p1217
        %p1219 = pneg %p1218
        // Predicated region
        $region117: #{tpu_custom_call.1} parent=79 // pred_check
          _
        $region118: #{tpu_custom_call.1} parent=79 // pred_check_branch
          %1221 = sbr.rel (%p1218) target = $region120
        $region119: #{tpu_custom_call.1} parent=79 // pred_region
          %s1222 = ssub.s32 %s37, 9
          %p1223 = scmp.gt.s32.totalorder %s1222, 0
          %s1224 = scalar_select %p1223, %s1222, 0
          %v1225 = vld [vmem:[#allocation5] sm:$0xff]
          %v1226 = vld [vmem:[#allocation5 + $0x8] sm:$0xff]
          %v1227 = vld [vmem:[#allocation5 + $0x10] sm:$0xff]
          %v1228 = vld [vmem:[#allocation5 + $0x18] sm:$0xff]
          %s1229 = smul.u32 %s1224, 2
          %s1230 = smul.addr %s1229, 8
          %s1231 = scalar_lea.vmem [#allocation4], %s1230
          %v1232 = vld [vmem:[%s1231] sm:$0xff]
          %v1233 = vld [vmem:[%s1231 + $0x8] sm:$0xff]
          %v1234 = vld [vmem:[%s617] sm:$0xf]
          %v1235 = vld [vmem:[%s617 + $0x4] sm:$0xf]
          %v1236 = vld [vmem:[%s617 + $0x8] sm:$0xf]
          %v1237 = vld [vmem:[%s617 + $0xc] sm:$0xf]
          %v1242 = vunpack.c.l.b16 %v1234
          %v1243 = vunpack.c.l.b16 %v1235
          %v1244 = vunpack.c.l.b16 %v1236
          %v1245 = vunpack.c.l.b16 %v1237
          %v1246 = vpack.c.b16 %v1243, %v1242
          %v1247 = vpack.c.b16 %v1245, %v1244
          %vm1250 = vcmask 261120
          %v1252 = vsel %vm1250, %v1232, 0
          %v1255 = vsel %vm1250, %v1233, 0
          %1257 = vmatprep.subr.bf16.mxu0 0
          %1258 = vmatpush1.bf16.msra.mxu0 %v1246
          %1259 = vmatprep.subr.bf16.mxu0 0
          %1260 = vmatpush1.bf16.msra.mxu0 %v1247
          %1261 = vmatprep.subr.bf16.mxu0 0
          %1262 = vmatpush1.bf16.msra.mxu0 0
          %1263 = vmatprep.subr.bf16.mxu0 0
          %1264 = vmatpush1.bf16.msra.mxu0 0
          %1265 = vmatprep.subr.bf16.mxu0 0
          %1266 = vmatpush1.bf16.msra.mxu0 0
          %1267 = vmatprep.subr.bf16.mxu0 0
          %1268 = vmatpush1.bf16.msra.mxu0 0
          %1269 = vmatprep.subr.bf16.mxu0 0
          %1270 = vmatpush1.bf16.msra.mxu0 0
          %1271 = vmatprep.subr.bf16.mxu0 0
          %1272 = vmatpush1.bf16.msra.mxu0 0
          %1273 = vmatprep.subr.bf16.mxu0 0
          %1274 = vmatpush1.bf16.msra.mxu0 0
          %1275 = vmatprep.subr.bf16.mxu0 0
          %1276 = vmatpush1.bf16.msra.mxu0 0
          %1277 = vmatprep.subr.bf16.mxu0 0
          %1278 = vmatpush1.bf16.msra.mxu0 0
          %1279 = vmatprep.subr.bf16.mxu0 0
          %1280 = vmatpush1.bf16.msra.mxu0 0
          %1281 = vmatprep.subr.bf16.mxu0 0
          %1282 = vmatpush1.bf16.msra.mxu0 0
          %1283 = vmatprep.subr.bf16.mxu0 0
          %1284 = vmatpush1.bf16.msra.mxu0 0
          %1285 = vmatprep.subr.bf16.mxu0 0
          %1286 = vmatpush1.bf16.msra.mxu0 0
          %1287 = vmatprep.subr.bf16.mxu0 0
          %1288 = vmatpush1.bf16.msra.mxu0 0
          %1289 = vmatprep.mubr.bf16.mxu0 0
          %1290 = vmatmul.mubr.bf16.gmra.mrb[0].mxu0 %v1252
          %v1291 = vpop.f32.mrb[0].mxu0
          %v1292 = vadd.f32 0.0, %v1291
          %v1293 = vpop.f32.mrb[0].mxu0
          %v1294 = vpop.f32.mrb[0].mxu0
          %v1295 = vadd.f32 0.0, %v1294
          %v1296 = vpop.f32.mrb[0].mxu0
          %1297 = vmatprep.mubr.bf16.mxu0 0
          %1298 = vmatmul.mubr.bf16.gmra.mrb[0].mxu0 %v1255
          %v1299 = vpop.f32.mrb[0].mxu0
          %v1300 = vadd.f32 0.0, %v1299
          %v1301 = vpop.f32.mrb[0].mxu0
          %v1302 = vpop.f32.mrb[0].mxu0
          %v1303 = vadd.f32 0.0, %v1302
          %v1304 = vpop.f32.mrb[0].mxu0
          %1305 = vdwg.mxu0
          %v1306 = vadd.f32 %v1225, %v1292
          %v1307 = vadd.f32 %v1226, %v1295
          %v1308 = vadd.f32 %v1227, %v1300
          %v1309 = vadd.f32 %v1228, %v1303
          %1310 = vst.msk [vmem:[#allocation5] sm:$0xff] %vm1250, %v1306
          %1311 = vst.msk [vmem:[#allocation5 + $0x8] sm:$0xff] %vm1250, %v1307
          %1312 = vst.msk [vmem:[#allocation5 + $0x10] sm:$0xff] %vm1250, %v1308
          %1313 = vst.msk [vmem:[#allocation5 + $0x18] sm:$0xff] %vm1250, %v1309
        $region120: #{tpu_custom_call.1} parent=79 // pred_fallthru
          _
        %p1314 = scmp.eq.s32.totalorder %s37, 18
        // Predicated region
        $region121: #{tpu_custom_call.1} parent=79 // pred_check
          %p1315 = pneg %p1314
        $region122: #{tpu_custom_call.1} parent=79 // pred_check_branch
          %1317 = sbr.rel (%p1315) target = $region124
        $region123: #{tpu_custom_call.1} parent=79 // pred_region
          %v1318 = vld [vmem:[#allocation5] sm:$0xff]
          %v1319 = vld [vmem:[#allocation5 + $0x8] sm:$0xff]
          %v1320 = vld [vmem:[#allocation5 + $0x10] sm:$0xff]
          %v1321 = vld [vmem:[#allocation5 + $0x18] sm:$0xff]
          %v1322 = vld [vmem:[%s9] sm:$0x1]
          %v1324 = vlaneseq
          %v1325 = vshrl.u32 %v1324, 7
          %v1326 = vsub.s32 0, %v1325
          %v1327 = vrot.slane %v1322, %v1326
          %v1329 = vadd.f32 %v1318, %v1327
          %v1330 = vadd.f32 %v1319, %v1327
          %v1331 = vadd.f32 %v1320, %v1327
          %v1332 = vadd.f32 %v1321, %v1327
          %s1333 = scalar_lea.vmem %s5, 1
          %v1334 = vld [vmem:[%s1333] sm:$0x1]
          %s1335 = scalar_lea.vmem %s4, 32
          %v1336 = vld [vmem:[%s1335] sm:$0xff]
          %v1337 = vld [vmem:[%s1335 + $0x8] sm:$0xff]
          %v1338 = vld [vmem:[%s1335 + $0x10] sm:$0xff]
          %v1339 = vld [vmem:[%s1335 + $0x18] sm:$0xff]
          %v1341 = vlaneseq
          %v1342 = vshrl.u32 %v1341, 7
          %v1343 = vsub.s32 0, %v1342
          %v1344 = vrot.slane %v1334, %v1343
          %1347 = vset.pattern.permute.xlu0 0
          %1348 = vperm.xlu0 %1347, %v1336
          %v1349 = vpop.permute.xlu0 %1348
          %1352 = vset.pattern.permute.xlu0 0
          %1353 = vperm.xlu0 %1352, %v1337
          %v1354 = vpop.permute.xlu0 %1353
          %1357 = vset.pattern.permute.xlu0 0
          %1358 = vperm.xlu0 %1357, %v1338
          %v1359 = vpop.permute.xlu0 %1358
          %1362 = vset.pattern.permute.xlu0 0
          %1363 = vperm.xlu0 %1362, %v1339
          %v1364 = vpop.permute.xlu0 %1363
          %v1366 = vmul.f32 %v1344, %v1349
          %v1367 = vmul.f32 %v1344, %v1354
          %v1368 = vmul.f32 %v1344, %v1359
          %v1369 = vmul.f32 %v1344, %v1364
          %v1370 = vadd.f32 %v1329, %v1366
          %v1371 = vadd.f32 %v1330, %v1367
          %v1372 = vadd.f32 %v1331, %v1368
          %v1373 = vadd.f32 %v1332, %v1369
          %vm1374 = vcmp.ge.f32.partialorder %v1370, 0.0
          %vm1375 = vcmp.ge.f32.partialorder %v1371, 0.0
          %vm1376 = vcmp.ge.f32.partialorder %v1372, 0.0
          %vm1377 = vcmp.ge.f32.partialorder %v1373, 0.0
          %v1378 = vmul.f32 %v1370, 0.2
          %v1379 = vmul.f32 %v1371, 0.2
          %v1380 = vmul.f32 %v1372, 0.2
          %v1381 = vmul.f32 %v1373, 0.2
          %v1382 = vsel %vm1374, %v1370, %v1378
          %v1383 = vsel %vm1375, %v1371, %v1379
          %v1384 = vsel %vm1376, %v1372, %v1380
          %v1385 = vsel %vm1377, %v1373, %v1381
          %vm1386 = vcmask 261120
          %v1387 = vsel %vm1386, %v1382, 0.0
          %v1388 = vsel %vm1386, %v1383, 0.0
          %v1389 = vadd.f32 %v1387, %v1388
          %v1390 = vrot.slane %v1389, 4
          %v1391 = vadd.f32 %v1389, %v1390
          %v1392 = vrot.slane %v1391, 2
          %v1393 = vadd.f32 %v1391, %v1392
          %v1394 = vrot.slane %v1393, 1
          %v1395 = vadd.f32 %v1393, %v1394
          %v1396 = vsel %vm1386, %v1384, 0.0
          %v1397 = vsel %vm1386, %v1385, 0.0
          %v1398 = vadd.f32 %v1396, %v1397
          %v1399 = vrot.slane %v1398, 4
          %v1400 = vadd.f32 %v1398, %v1399
          %v1401 = vrot.slane %v1400, 2
          %v1402 = vadd.f32 %v1400, %v1401
          %v1403 = vrot.slane %v1402, 1
          %v1404 = vadd.f32 %v1402, %v1403
          %v1405 = vrcp.pop 16.0
          %v1406 = vmul.f32 %v1395, %v1405
          %v1407 = vmul.f32 %v1404, %v1405
          %v1408 = vsub.f32 %v1382, %v1406
          %v1409 = vsub.f32 %v1383, %v1406
          %v1410 = vsub.f32 %v1384, %v1407
          %v1411 = vsub.f32 %v1385, %v1407
          %v1412 = vmul.f32 %v1408, %v1408
          %v1413 = vmul.f32 %v1409, %v1409
          %v1414 = vmul.f32 %v1410, %v1410
          %v1415 = vmul.f32 %v1411, %v1411
          %v1416 = vsel %vm1386, %v1412, 0.0
          %v1417 = vsel %vm1386, %v1413, 0.0
          %v1418 = vadd.f32 %v1416, %v1417
          %v1419 = vrot.slane %v1418, 4
          %v1420 = vadd.f32 %v1418, %v1419
          %v1421 = vrot.slane %v1420, 2
          %v1422 = vadd.f32 %v1420, %v1421
          %v1423 = vrot.slane %v1422, 1
          %v1424 = vadd.f32 %v1422, %v1423
          %v1425 = vsel %vm1386, %v1414, 0.0
          %v1426 = vsel %vm1386, %v1415, 0.0
          %v1427 = vadd.f32 %v1425, %v1426
          %v1428 = vrot.slane %v1427, 4
          %v1429 = vadd.f32 %v1427, %v1428
          %v1430 = vrot.slane %v1429, 2
          %v1431 = vadd.f32 %v1429, %v1430
          %v1432 = vrot.slane %v1431, 1
          %v1433 = vadd.f32 %v1431, %v1432
          %v1434 = vmul.f32 %v1424, %v1405
          %v1435 = vmul.f32 %v1433, %v1405
          %v1436 = vadd.f32 %v1434, 1e-05
          %v1437 = vadd.f32 %v1435, 1e-05
          %v1438 = vrsqrt.pop %v1436
          %v1439 = vrsqrt.pop %v1437
          %v1440 = vmul.f32 %v1408, %v1438
          %v1441 = vmul.f32 %v1409, %v1438
          %v1442 = vmul.f32 %v1410, %v1439
          %v1443 = vmul.f32 %v1411, %v1439
          %v1444 = vld [vmem:[#allocation2] sm:$0x3]
          %v1445 = vmul.f32 %v1444, 0.25
          %v1446 = vpack.c.bf16 %v1445, %v1445
          %v1447 = vld [vmem:[%s608] sm:$0xf]
          %v1448 = vld [vmem:[%s608 + $0x4] sm:$0xf]
          %v1449 = vld [vmem:[%s608 + $0x8] sm:$0xf]
          %v1450 = vld [vmem:[%s608 + $0xc] sm:$0xf]
          %s1451 = scalar_lea.vmem %s7, 1
          %v1452 = vld [vmem:[%s1451] sm:$0x1]
          %v1454 = vlaneseq
          %v1455 = vshrl.u32 %v1454, 7
          %v1456 = vsub.s32 0, %v1455
          %v1457 = vrot.slane %v1452, %v1456
          %v1463 = vunpack.c.l.b16 %v1447
          %v1464 = vunpack.c.l.b16 %v1448
          %v1465 = vunpack.c.l.b16 %v1449
          %v1466 = vunpack.c.l.b16 %v1450
          %v1467 = vpack.c.b16 %v1464, %v1463
          %v1468 = vpack.c.b16 %v1466, %v1465
          %v1472 = vsel %vm1386, %v1446, 0
          %1474 = vmatprep.subr.bf16.mxu0 0
          %1475 = vmatpush1.bf16.msra.mxu0 %v1467
          %1476 = vmatprep.subr.bf16.mxu0 0
          %1477 = vmatpush1.bf16.msra.mxu0 %v1468
          %1478 = vmatprep.subr.bf16.mxu0 0
          %1479 = vmatpush1.bf16.msra.mxu0 0
          %1480 = vmatprep.subr.bf16.mxu0 0
          %1481 = vmatpush1.bf16.msra.mxu0 0
          %1482 = vmatprep.subr.bf16.mxu0 0
          %1483 = vmatpush1.bf16.msra.mxu0 0
          %1484 = vmatprep.subr.bf16.mxu0 0
          %1485 = vmatpush1.bf16.msra.mxu0 0
          %1486 = vmatprep.subr.bf16.mxu0 0
          %1487 = vmatpush1.bf16.msra.mxu0 0
          %1488 = vmatprep.subr.bf16.mxu0 0
          %1489 = vmatpush1.bf16.msra.mxu0 0
          %1490 = vmatprep.subr.bf16.mxu0 0
          %1491 = vmatpush1.bf16.msra.mxu0 0
          %1492 = vmatprep.subr.bf16.mxu0 0
          %1493 = vmatpush1.bf16.msra.mxu0 0
          %1494 = vmatprep.subr.bf16.mxu0 0
          %1495 = vmatpush1.bf16.msra.mxu0 0
          %1496 = vmatprep.subr.bf16.mxu0 0
          %1497 = vmatpush1.bf16.msra.mxu0 0
          %1498 = vmatprep.subr.bf16.mxu0 0
          %1499 = vmatpush1.bf16.msra.mxu0 0
          %1500 = vmatprep.subr.bf16.mxu0 0
          %1501 = vmatpush1.bf16.msra.mxu0 0
          %1502 = vmatprep.subr.bf16.mxu0 0
          %1503 = vmatpush1.bf16.msra.mxu0 0
          %1504 = vmatprep.subr.bf16.mxu0 0
          %1505 = vmatpush1.bf16.msra.mxu0 0
          %1506 = vmatprep.mubr.bf16.mxu0 0
          %1507 = vmatmul.mubr.bf16.gmra.mrb[0].mxu0 %v1472
          %v1508 = vpop.f32.mrb[0].mxu0
          %v1509 = vadd.f32 %v1457, %v1508
          %v1510 = vpop.f32.mrb[0].mxu0
          %v1511 = vpop.f32.mrb[0].mxu0
          %v1512 = vpop.f32.mrb[0].mxu0
          %1513 = vdwg.mxu0
          %v1516 = vunpack.c.l.s4 1966171168
          %v1517 = vunpack.c.0.s8 %v1516
          %v1518 = vlaneseq
          %v1519 = vshrl.u32 %v1518, 7
          %v1520 = vsub.s32 %v1517, %v1519
          %v1521 = vrot.slane %v1509, %v1520
          %v1522 = vcombine.high %v1521, %v1521
          %v1524 = vunpack.c.l.s4 1966171168
          %v1525 = vunpack.c.0.s8 %v1524
          %v1526 = vlaneseq
          %v1527 = vshrl.u32 %v1526, 7
          %v1528 = vsub.s32 %v1525, %v1527
          %v1529 = vrot.slane %v1521, %v1528
          %v1531 = vunpack.c.l.s4 1966171168
          %v1532 = vunpack.c.0.s8 %v1531
          %v1533 = vlaneseq
          %v1534 = vshrl.u32 %v1533, 7
          %v1535 = vsub.s32 %v1532, %v1534
          %v1536 = vrot.slane %v1522, %v1535
          %v1537 = vlaneseq
          %v1538 = vshrl.u32 %v1537, 7
          %v1539 = vsub.s32 0, %v1538
          %v1540 = vrot.slane %v1529, %v1539
          %v1541 = vlaneseq
          %v1542 = vshrl.u32 %v1541, 7
          %v1543 = vsub.s32 0, %v1542
          %v1544 = vrot.slane %v1536, %v1543
          %v1547 = vmul.f32 %v1540, %v1440
          %v1548 = vmul.f32 %v1540, %v1441
          %v1549 = vmul.f32 %v1544, %v1442
          %v1550 = vmul.f32 %v1544, %v1443
          %1551 = vrot.lane.b32.xlu0 %v1540, 96
          %v1552 = vpop.permute.xlu0 %1551
          %1553 = vrot.lane.b32.xlu0 %v1544, 96
          %v1554 = vpop.permute.xlu0 %1553
          %v1557 = vadd.f32 %v1547, %v1552
          %v1558 = vadd.f32 %v1548, %v1552
          %v1559 = vadd.f32 %v1549, %v1554
          %v1560 = vadd.f32 %v1550, %v1554
          %v1561 = vmul.f32 %v1557, 0.25
          %v1562 = vmul.f32 %v1558, 0.25
          %v1563 = vmul.f32 %v1559, 0.25
          %v1564 = vmul.f32 %v1560, 0.25
          %v1565 = vpack.c.bf16 %v1562, %v1561
          %v1566 = vpack.c.bf16 %v1564, %v1563
          %v1567 = vld [vmem:[#allocation14] sm:$0xf]
          %v1568 = vld [vmem:[#allocation14 + $0x4] sm:$0xf]
          %v1569 = vld [vmem:[#allocation14 + $0x8] sm:$0xf]
          %v1570 = vld [vmem:[#allocation14 + $0xc] sm:$0xf]
          %v1571 = vld [vmem:[#allocation15] sm:$0x1]
          %v1573 = vlaneseq
          %v1574 = vshrl.u32 %v1573, 7
          %v1575 = vsub.s32 0, %v1574
          %v1576 = vrot.slane %v1571, %v1575
          %v1582 = vunpack.c.l.b16 %v1567
          %v1583 = vunpack.c.l.b16 %v1568
          %v1584 = vunpack.c.l.b16 %v1569
          %v1585 = vunpack.c.l.b16 %v1570
          %v1586 = vpack.c.b16 %v1583, %v1582
          %v1587 = vpack.c.b16 %v1585, %v1584
          %v1591 = vsel %vm1386, %v1565, 0
          %v1594 = vsel %vm1386, %v1566, 0
          %1596 = vmatprep.subr.bf16.mxu0 0
          %1597 = vmatpush1.bf16.msra.mxu0 %v1586
          %1598 = vmatprep.subr.bf16.mxu0 0
          %1599 = vmatpush1.bf16.msra.mxu0 %v1587
          %1600 = vmatprep.subr.bf16.mxu0 0
          %1601 = vmatpush1.bf16.msra.mxu0 0
          %1602 = vmatprep.subr.bf16.mxu0 0
          %1603 = vmatpush1.bf16.msra.mxu0 0
          %1604 = vmatprep.subr.bf16.mxu0 0
          %1605 = vmatpush1.bf16.msra.mxu0 0
          %1606 = vmatprep.subr.bf16.mxu0 0
          %1607 = vmatpush1.bf16.msra.mxu0 0
          %1608 = vmatprep.subr.bf16.mxu0 0
          %1609 = vmatpush1.bf16.msra.mxu0 0
          %1610 = vmatprep.subr.bf16.mxu0 0
          %1611 = vmatpush1.bf16.msra.mxu0 0
          %1612 = vmatprep.subr.bf16.mxu0 0
          %1613 = vmatpush1.bf16.msra.mxu0 0
          %1614 = vmatprep.subr.bf16.mxu0 0
          %1615 = vmatpush1.bf16.msra.mxu0 0
          %1616 = vmatprep.subr.bf16.mxu0 0
          %1617 = vmatpush1.bf16.msra.mxu0 0
          %1618 = vmatprep.subr.bf16.mxu0 0
          %1619 = vmatpush1.bf16.msra.mxu0 0
          %1620 = vmatprep.subr.bf16.mxu0 0
          %1621 = vmatpush1.bf16.msra.mxu0 0
          %1622 = vmatprep.subr.bf16.mxu0 0
          %1623 = vmatpush1.bf16.msra.mxu0 0
          %1624 = vmatprep.subr.bf16.mxu0 0
          %1625 = vmatpush1.bf16.msra.mxu0 0
          %1626 = vmatprep.subr.bf16.mxu0 0
          %1627 = vmatpush1.bf16.msra.mxu0 0
          %1628 = vmatprep.mubr.bf16.mxu0 0
          %1629 = vmatmul.mubr.bf16.gmra.mrb[0].mxu0 %v1591
          %v1630 = vpop.f32.mrb[0].mxu0
          %v1631 = vadd.f32 %v1576, %v1630
          %v1632 = vpop.f32.mrb[0].mxu0
          %v1633 = vpop.f32.mrb[0].mxu0
          %v1634 = vadd.f32 %v1576, %v1633
          %v1635 = vpop.f32.mrb[0].mxu0
          %1636 = vmatprep.mubr.bf16.mxu0 0
          %1637 = vmatmul.mubr.bf16.gmra.mrb[0].mxu0 %v1594
          %v1638 = vpop.f32.mrb[0].mxu0
          %v1639 = vadd.f32 %v1576, %v1638
          %v1640 = vpop.f32.mrb[0].mxu0
          %v1641 = vpop.f32.mrb[0].mxu0
          %v1642 = vadd.f32 %v1576, %v1641
          %v1643 = vpop.f32.mrb[0].mxu0
          %1644 = vdwg.mxu0
          %vm1645 = vcmp.ge.f32.partialorder %v1631, 0.0
          %vm1646 = vcmp.ge.f32.partialorder %v1634, 0.0
          %vm1647 = vcmp.ge.f32.partialorder %v1639, 0.0
          %vm1648 = vcmp.ge.f32.partialorder %v1642, 0.0
          %v1649 = vmul.f32 %v1631, 0.2
          %v1650 = vmul.f32 %v1634, 0.2
          %v1651 = vmul.f32 %v1639, 0.2
          %v1652 = vmul.f32 %v1642, 0.2
          %v1653 = vsel %vm1645, %v1631, %v1649
          %v1654 = vsel %vm1646, %v1634, %v1650
          %v1655 = vsel %vm1647, %v1639, %v1651
          %v1656 = vsel %vm1648, %v1642, %v1652
          %v1657 = vmul.f32 %v1653, 0.8164966
          %v1658 = vmul.f32 %v1654, 0.8164966
          %v1659 = vmul.f32 %v1655, 0.8164966
          %v1660 = vmul.f32 %v1656, 0.8164966
          %v1661 = vld [vmem:[%s13] sm:$0xff]
          %v1662 = vld [vmem:[%s13 + $0x8] sm:$0xff]
          %v1663 = vld [vmem:[%s13 + $0x10] sm:$0xff]
          %v1664 = vld [vmem:[%s13 + $0x18] sm:$0xff]
          %v1665 = vld [vmem:[%s13 + $0x20] sm:$0xff]
          %v1666 = vld [vmem:[%s13 + $0x28] sm:$0xff]
          %v1667 = vld [vmem:[%s13 + $0x30] sm:$0xff]
          %v1668 = vld [vmem:[%s13 + $0x38] sm:$0xff]
          %v1669 = vld [vmem:[%s13 + $0x40] sm:$0xff]
          %v1670 = vld [vmem:[%s13 + $0x48] sm:$0xff]
          %v1671 = vld [vmem:[%s13 + $0x50] sm:$0xff]
          %v1672 = vld [vmem:[%s13 + $0x58] sm:$0xff]
          %v1673 = vld [vmem:[%s13 + $0x60] sm:$0xff]
          %v1674 = vld [vmem:[%s13 + $0x68] sm:$0xff]
          %v1675 = vld [vmem:[%s13 + $0x70] sm:$0xff]
          %v1676 = vld [vmem:[%s13 + $0x78] sm:$0xff]
          %v1677 = vld [vmem:[%s14] sm:$0x1]
          %v1679 = vlaneseq
          %v1680 = vshrl.u32 %v1679, 7
          %v1681 = vsub.s32 0, %v1680
          %v1682 = vrot.slane %v1677, %v1681
          %1684 = vmatprep.subr.mxu0 0.0
          %1685 = vmatpush1.msra.mxu0 %v1661
          %1686 = vmatprep.subr.mxu0 0.0
          %1687 = vmatpush1.msra.mxu0 %v1662
          %1688 = vmatprep.subr.mxu0 0.0
          %1689 = vmatpush1.msra.mxu0 %v1663
          %1690 = vmatprep.subr.mxu0 0.0
          %1691 = vmatpush1.msra.mxu0 %v1664
          %1692 = vmatprep.subr.mxu0 0.0
          %1693 = vmatpush1.msra.mxu0 %v1665
          %1694 = vmatprep.subr.mxu0 0.0
          %1695 = vmatpush1.msra.mxu0 %v1666
          %1696 = vmatprep.subr.mxu0 0.0
          %1697 = vmatpush1.msra.mxu0 %v1667
          %1698 = vmatprep.subr.mxu0 0.0
          %1699 = vmatpush1.msra.mxu0 %v1668
          %1700 = vmatprep.subr.mxu0 0.0
          %1701 = vmatpush1.msra.mxu0 %v1669
          %1702 = vmatprep.subr.mxu0 0.0
          %1703 = vmatpush1.msra.mxu0 %v1670
          %1704 = vmatprep.subr.mxu0 0.0
          %1705 = vmatpush1.msra.mxu0 %v1671
          %1706 = vmatprep.subr.mxu0 0.0
          %1707 = vmatpush1.msra.mxu0 %v1672
          %1708 = vmatprep.subr.mxu0 0.0
          %1709 = vmatpush1.msra.mxu0 %v1673
          %1710 = vmatprep.subr.mxu0 0.0
          %1711 = vmatpush1.msra.mxu0 %v1674
          %1712 = vmatprep.subr.mxu0 0.0
          %1713 = vmatpush1.msra.mxu0 %v1675
          %1714 = vmatprep.subr.mxu0 0.0
          %1715 = vmatpush1.msra.mxu0 %v1676
          %1716 = vmatprep.subr.mxu0 0.0
          %1717 = vmatpush1.msra.mxu0 0.0
          %1718 = vmatprep.subr.mxu0 0.0
          %1719 = vmatpush1.msra.mxu0 0.0
          %1720 = vmatprep.subr.mxu0 0.0
          %1721 = vmatpush1.msra.mxu0 0.0
          %1722 = vmatprep.subr.mxu0 0.0
          %1723 = vmatpush1.msra.mxu0 0.0
          %1724 = vmatprep.subr.mxu0 0.0
          %1725 = vmatpush1.msra.mxu0 0.0
          %1726 = vmatprep.subr.mxu0 0.0
          %1727 = vmatpush1.msra.mxu0 0.0
          %1728 = vmatprep.subr.mxu0 0.0
          %1729 = vmatpush1.msra.mxu0 0.0
          %1730 = vmatprep.subr.mxu0 0.0
          %1731 = vmatpush1.msra.mxu0 0.0
          %1732 = vmatprep.subr.mxu0 0.0
          %1733 = vmatpush1.msra.mxu0 0.0
          %1734 = vmatprep.subr.mxu0 0.0
          %1735 = vmatpush1.msra.mxu0 0.0
          %1736 = vmatprep.subr.mxu0 0.0
          %1737 = vmatpush1.msra.mxu0 0.0
          %1738 = vmatprep.subr.mxu0 0.0
          %1739 = vmatpush1.msra.mxu0 0.0
          %1740 = vmatprep.subr.mxu0 0.0
          %1741 = vmatpush1.msra.mxu0 0.0
          %1742 = vmatprep.subr.mxu0 0.0
          %1743 = vmatpush1.msra.mxu0 0.0
          %1744 = vmatprep.subr.mxu0 0.0
          %1745 = vmatpush1.msra.mxu0 0.0
          %1746 = vmatprep.subr.mxu0 0.0
          %1747 = vmatpush1.msra.mxu0 0.0
          %1748 = vmatprep.mubr.f32.mxu0 0.0
          %1749 = vmatmul.mubr.f32.gmra.mrb[0].mxu0 %v1657
          %v1750 = vpop.f32.mrb[0].mxu0
          %v1751 = vadd.f32 %v1682, %v1750
          %v1752 = vpop.f32.mrb[0].mxu0
          %1753 = vmatprep.mubr.f32.mxu0 0.0
          %1754 = vmatmul.mubr.f32.gmra.mrb[0].mxu0 %v1658
          %v1755 = vpop.f32.mrb[0].mxu0
          %v1756 = vadd.f32 %v1682, %v1755
          %v1757 = vpop.f32.mrb[0].mxu0
          %1758 = vmatprep.mubr.f32.mxu0 0.0
          %1759 = vmatmul.mubr.f32.gmra.mrb[0].mxu0 %v1659
          %v1760 = vpop.f32.mrb[0].mxu0
          %v1761 = vadd.f32 %v1682, %v1760
          %v1762 = vpop.f32.mrb[0].mxu0
          %1763 = vmatprep.mubr.f32.mxu0 0.0
          %1764 = vmatmul.mubr.f32.gmra.mrb[0].mxu0 %v1660
          %v1765 = vpop.f32.mrb[0].mxu0
          %v1766 = vadd.f32 %v1682, %v1765
          %v1767 = vpop.f32.mrb[0].mxu0
          %1768 = vdwg.mxu0
          %vm1769 = vcmp.ge.f32.partialorder %v1751, 0.0
          %vm1770 = vcmp.ge.f32.partialorder %v1756, 0.0
          %vm1771 = vcmp.ge.f32.partialorder %v1761, 0.0
          %vm1772 = vcmp.ge.f32.partialorder %v1766, 0.0
          %v1773 = vmul.f32 %v1751, 0.2
          %v1774 = vmul.f32 %v1756, 0.2
          %v1775 = vmul.f32 %v1761, 0.2
          %v1776 = vmul.f32 %v1766, 0.2
          %v1777 = vsel %vm1769, %v1751, %v1773
          %v1778 = vsel %vm1770, %v1756, %v1774
          %v1779 = vsel %vm1771, %v1761, %v1775
          %v1780 = vsel %vm1772, %v1766, %v1776
          %1781 = vst [vmem:[#allocation17] sm:$0xff] %v1777
          %1782 = vst [vmem:[#allocation17 + $0x8] sm:$0xff] %v1778
          %1783 = vst [vmem:[#allocation17 + $0x10] sm:$0xff] %v1779
          %1784 = vst [vmem:[#allocation17 + $0x18] sm:$0xff] %v1780
        $region124: #{tpu_custom_call.1} parent=79 // pred_fallthru
          _
        // Predicated region
        $region125: #{tpu_custom_call.1} parent=79 // pred_check
          %p1785 = pneg %p413
        $region126: #{tpu_custom_call.1} parent=79 // pred_check_branch
          %1787 = sbr.rel (%p1785) target = $region128
        $region127: #{tpu_custom_call.1} parent=79 // pred_region
          %s1789 = ssub.s32 512, 512
          %1790 = vsyncadd [#allocation8], %s1789
          %s1791 = sshll.u32 [#allocation17], 4
          %s1792 = int_to_ptr.vmem [resolvable:$true] %s1791
          %1797 = dma.vmem_to_hbm [thread:$0]  %s1792, 512, %s15, [#allocation8], 128, 128, 8
        $region128: #{tpu_custom_call.1} parent=79 // pred_fallthru
          _
        // Predicated region
        $region129: #{tpu_custom_call.1} parent=79 // pred_check
          %p1798 = pneg %p413
        $region130: #{tpu_custom_call.1} parent=79 // pred_check_branch
          %1800 = sbr.rel (%p1798) target = $region132
        $region131: #{tpu_custom_call.1} parent=79 // pred_region
          %1801 = dma.done [#allocation8], 512
        $region132: #{tpu_custom_call.1} parent=79 // pred_fallthru
          _
      $region80: #{tpu_custom_call.1} parent=5 // pred_fallthru
        _
      %p1802 = scmp.le.s32.totalorder 2, %s32
      // Predicated region
      $region133: #{tpu_custom_call.1} parent=5 // pred_check
        %p1803 = pneg %p1802
      $region134: #{tpu_custom_call.1} parent=5 // pred_check_branch
        %1805 = sbr.rel (%p1803) target = $region136
      $region135: #{tpu_custom_call.1} parent=5 // pred_region
        %s1806 = ssub.s32 %s32, 2
      $region136: #{tpu_custom_call.1} parent=5 // pred_fallthru
        _
    $region6: #{tpu_custom_call.1} parent=1 // loop_footer
      %s36 = sadd.s32 1, %s32
    $region7: #{tpu_custom_call.1} parent=1 // loop_footer_branch
      %31 = sbr.rel target = $region3
    $region8: #{tpu_custom_call.1} parent=1 // loop_exit
      _
    %1807 = vsyncpa [#allocation7], 1
    %s1808 = scalar_lea.sflag [#allocation7], 1
    %1809 = vsyncpa %s1808, 1
    %1810 = vsyncpa [#allocation10], 1
    %s1811 = scalar_lea.sflag [#allocation10], 1
    %1812 = vsyncpa %s1811, 1
    %1813 = vsyncpa [#allocation13], 1
    %s1814 = scalar_lea.sflag [#allocation13], 1
    %1815 = vsyncpa %s1814, 1
    %1816 = vsyncpa [#allocation16], 1
    %1817 = vsyncpa [#allocation8], 1
    %s1818 = scalar_lea.sflag [#allocation8], 1
    %1819 = vsyncpa %s1818, 1

</llo_original>
